<compile_context>
chip_gen: v6e
topology: v6e:2x2x1
jax: 0.10.0
libtpu: 0.0.40
codegen_flags: <defaults>
</compile_context>

<pallas_src>
import jax
import jax.numpy as jnp
import numpy as np
from jax import lax
from jax.experimental import pallas as pl
from jax.experimental.pallas import tpu as pltpu


def _make_nf_kernel(K, D, Dp, mxu_precision):
    """K planar flows, batch-on-lanes compute layout.

    Ref layouts (bt = batch tile on the 128-lane axis, P = 1 + 2*D):
      z_ref      : (D, bt)          z.dtype, lane-dense
      params_ref : (K, bt, P)       untransposed module layout
      sel_ref    : (8 + 2*Dp, P)    one-hot selector, params dtype
      z_out_ref  : (D, bt)          z.dtype, lane-dense
      ladj_ref   : (1, bt)          float32, lane-dense
    """
    f32 = jnp.float32
    dn = (((1,), (1,)), ((), ()))          # contract last dims: A @ B^T

    def kernel(z_ref, params_ref, sel_ref, z_out_ref, ladj_ref):
        sel = sel_ref[...]                                    # (R, P)
        z0 = z_ref[...].astype(f32)                           # (D, bt)
        ladj0 = jnp.zeros(ladj_ref.shape, f32)                # (1, bt)

        def body(k, carry):
            z, ladj = carry
            lam = params_ref[k]                               # (bt, P)
            # One-hot selection + transpose on the (idle) MXU:
            #   lamT[r, b] = sum_p sel[r, p] * lam[b, p]
            lamT = lax.dot_general(sel, lam, dn,
                                   precision=mxu_precision,
                                   preferred_element_type=f32)  # (R, bt)
            b = lamT[0:1, :]                                  # (1, bt)
            w = lamT[8:8 + D, :]                              # (D, bt)
            u = lamT[8 + Dp:8 + Dp + D, :]                    # (D, bt)

            lin = jnp.sum(z * w, axis=0, keepdims=True) + b   # (1, bt)
            t = jnp.tanh(lin)                                 # (1, bt)
            z = z + u * t                                     # (D, bt)

            # psi . u = (1 - tanh^2) * sum(w * u)   (factored form)
            wu = jnp.sum(w * u, axis=0, keepdims=True)        # (1, bt)
            ladj = ladj + jnp.log(jnp.abs(1.0 + (1.0 - t * t) * wu))
            return z, ladj

        # TODO(synk): for very large K*D, stream each flow's (bt, P) slab from
        # HBM with a manual 2-deep make_async_copy double buffer instead of
        # holding all K flows in VMEM at once (caps VMEM independently of K).
        z_fin, ladj_fin = lax.fori_loop(0, K, body, (z0, ladj0),
                                        unroll=min(K, 4))
        z_out_ref[...] = z_fin.astype(z_out_ref.dtype)
        ladj_ref[...] = ladj_fin                              # keep float32

    return kernel


_VMEM_BLOCK_BUDGET = 24 * 1024 * 1024   # double-buffered block bytes target
_MAX_BATCH_TILE = 512                   # ~85% of HBM roofline, low vreg pressure


def _pick_batch_tile(B, K, D, param_itemsize, z_itemsize):
    """Choose (batch_tile, padded_batch): VMEM-, megacore- and lane-aware."""
    Bp128 = -(-B // 128) * 128
    # Double-buffered VMEM bytes per batch lane per grid step:
    #   params block lane-padded to 128, z in + z out, ladj sublane-padded to 8.
    per_lane = 2 * (K * 128 * param_itemsize + 2 * D * z_itemsize + 8 * 4)
    cap = max(128, (_VMEM_BLOCK_BUDGET // per_lane) // 128 * 128)
    cap = min(cap, _MAX_BATCH_TILE)
    if Bp128 >= 256:
        # At least two grid steps so dimension_semantics=("parallel",) can
        # split the batch across the two v7x TensorCores.
        cap = min(cap, max(128, (Bp128 // 256) * 128))
    # Largest lane-aligned tile <= cap that divides the padded batch, so only
    # batches that are not multiples of 128 ever need wrapper-side padding.
    bt = 128
    for cand in range(cap, 127, -128):
        if Bp128 % cand == 0:
            bt = cand
            break
    return bt, Bp128


def normalizing_flow(z, flow_params):
    """z: (B, D); flow_params: (K, B, 1 + 2*D), float32 or bfloat16.

    Returns (z_K, sum_log_abs_det_jacobian) shaped (B, D) and (B, 1, 1).
    Passing bfloat16 flow_params halves the dominant HBM stream; in-kernel
    arithmetic is float32 either way and the log-det output is float32.
    """
    K, B, P = flow_params.shape
    Bz, D = z.shape
    assert P == 1 + 2 * D and Bz == B

    p_dtype = flow_params.dtype
    p_isize = jnp.dtype(p_dtype).itemsize
    z_isize = jnp.dtype(z.dtype).itemsize

    # One-hot selector: row 0 -> b, rows [8, 8+D) -> w, rows [8+Dp, 8+Dp+D) -> u
    # (8-aligned row groups so the post-matmul sublane slices are tile-aligned).
    Dp = -(-D // 8) * 8
    R = 8 + 2 * Dp
    sel_np = np.zeros((R, P), dtype=np.float32)
    sel_np[0, 0] = 1.0
    for d in range(D):
        sel_np[8 + d, 1 + d] = 1.0
        sel_np[8 + Dp + d, 1 + D + d] = 1.0
    sel = jnp.asarray(sel_np, dtype=p_dtype)

    bt, Bp = _pick_batch_tile(B, K, D, p_isize, z_isize)
    grid = (Bp // bt,)

    # z / z_out are the minor D-sized stream; one small transpose each keeps
    # every kernel load/store lane-dense and the z path bit-exact, and lets the
    # z input alias the z output.  flow_params (the dominant stream) is passed
    # through untouched.
    z_t = z.T                                                  # (D, B)
    params_p = flow_params
    if Bp != B:   # only for batches that are not a multiple of 128
        z_t = jnp.pad(z_t, ((0, 0), (0, Bp - B)))
        params_p = jnp.pad(flow_params, ((0, 0), (0, Bp - B), (0, 0)))

    # f32 params go through the MXU one-hot selection at HIGHEST precision
    # (multi-pass, ~1e-6-level error); bf16 params are selected bit-exactly.
    mxu_precision = (lax.Precision.HIGHEST
                     if p_dtype == jnp.dtype(jnp.float32)
                     else lax.Precision.DEFAULT)

    z_out_t, ladj_t = pl.pallas_call(
        _make_nf_kernel(K, D, Dp, mxu_precision),
        out_shape=(jax.ShapeDtypeStruct((D, Bp), z.dtype),
                   jax.ShapeDtypeStruct((1, Bp), jnp.float32)),
        grid_spec=pltpu.PrefetchScalarGridSpec(
            num_scalar_prefetch=0,
            grid=grid,
            in_specs=[
                pl.BlockSpec((D, bt), lambda i: (0, i)),        # z, lane-dense
                pl.BlockSpec((K, bt, P), lambda i: (0, i, 0)),  # params, as-is
                pl.BlockSpec((R, P), lambda i: (0, 0)),         # selector
            ],
            out_specs=(pl.BlockSpec((D, bt), lambda i: (0, i)),
                       pl.BlockSpec((1, bt), lambda i: (0, i))),
        ),
        compiler_params=pltpu.CompilerParams(
            dimension_semantics=("parallel",),
            vmem_limit_bytes=48 * 1024 * 1024),
        input_output_aliases={0: 0},
    )(z_t, params_p, sel)

    z_out = z_out_t[:, :B].T                                   # (B, D)
    sum_ladj = ladj_t[0, :B].reshape(B, 1, 1)                  # (B, 1, 1) f32
    return z_out, sum_ladj


def _reference(z, flow_params):
    """Pure-JAX mirror of the PyTorch forward pass (float32 math)."""
    D = z.shape[1]
    zk = z.astype(jnp.float32)
    fp = flow_params.astype(jnp.float32)
    sum_ladj = jnp.zeros((z.shape[0], 1, 1), jnp.float32)
    for i in range(fp.shape[0]):
        lam = fp[i]
        b = lam[:, 0:1]
        w = lam[:, 1:1 + D]
        u = lam[:, 1 + D:]
        t = jnp.tanh(jnp.sum(zk * w, axis=-1, keepdims=True) + b)
        zk = zk + u * t
        psi_u = (1.0 - t ** 2) * jnp.sum(w * u, axis=-1, keepdims=True)
        ladj = jnp.log(jnp.abs(1.0 + psi_u))
        sum_ladj = sum_ladj + ladj[:, :, None]
    return zk, sum_ladj


if __name__ == "__main__":
    # NormalizingFlow(K, D) has no learnable weights; the per-flow (b, w, u)
    # are inputs, generated deterministically here.  The 0.1 scale keeps
    # 1 + psi.u well away from zero so the log-det comparison is
    # well-conditioned.
    K, B, D = 3, 4, 8
    key = jax.random.PRNGKey(0)
    kz, kp = jax.random.split(key)
    z = jax.random.normal(kz, (B, D), dtype=jnp.float32)
    flow_params = 0.1 * jax.random.normal(kp, (K, B, 1 + 2 * D),
                                          dtype=jnp.float32)

    # --- float32 parameter path -------------------------------------------
    z_out, sum_ladj = normalizing_flow(z, flow_params)
    jax.block_until_ready((z_out, sum_ladj))
    z_ref, l_ref = _reference(z, flow_params)
    # Conservative tolerance: f32 parameters are routed through the MXU's
    # multi-pass f32 one-hot selection (typically ~1e-6 error at HIGHEST
    # precision); the slack keeps the check robust across TPU generations.
    np.testing.assert_allclose(np.asarray(z_out), np.asarray(z_ref),
                               rtol=5e-3, atol=5e-3)
    np.testing.assert_allclose(np.asarray(sum_ladj), np.asarray(l_ref),
                               rtol=5e-3, atol=5e-3)

    # --- bfloat16 parameter-streaming path (halved HBM traffic) ------------
    # The in-kernel one-hot selection of bf16 values is bit-exact and the
    # arithmetic stays float32, so compare against a reference fed the same
    # bf16 parameters.
    fp_bf16 = flow_params.astype(jnp.bfloat16)
    z_out_h, sum_ladj_h = normalizing_flow(z, fp_bf16)
    jax.block_until_ready((z_out_h, sum_ladj_h))
    z_ref_h, l_ref_h = _reference(z, fp_bf16)
    np.testing.assert_allclose(np.asarray(z_out_h), np.asarray(z_ref_h),
                               rtol=1e-4, atol=1e-4)
    np.testing.assert_allclose(np.asarray(sum_ladj_h), np.asarray(l_ref_h),
                               rtol=1e-4, atol=1e-4)

    print("KERNEL_OK")
</pallas_src>

<mosaic_0001>
module attributes {stable_mosaic.version = 11 : i64} {
  func.func @kernel(%arg0: i32, %arg1: memref<8x128xf32, #tpu.memory_space<vmem>>, %arg2: memref<3x128x17xf32, #tpu.memory_space<vmem>>, %arg3: memref<24x17xf32, #tpu.memory_space<vmem>>, %arg4: memref<8x128xf32, #tpu.memory_space<vmem>>, %arg5: memref<1x128xf32, #tpu.memory_space<vmem>>) attributes {dimension_semantics = [#tpu.dimension_semantics<parallel>], iteration_bounds = array<i64: 1>, scalar_prefetch = 0 : i64, scratch_operands = 0 : i64, tpu.core_type = #tpu.core_type<tc>, window_params = [{transform_indices = @transform_0, window_bounds = array<i64: 8, 128>}, {transform_indices = @transform_1, window_bounds = array<i64: 3, 128, 17>}, {pipeline_mode = #tpu.pipeline_mode<synchronous>, transform_indices = @transform_2, window_bounds = array<i64: 24, 17>}, {transform_indices = @transform_3, window_bounds = array<i64: 8, 128>}, {transform_indices = @transform_4, window_bounds = array<i64: 1, 128>}]} {
    %c0 = arith.constant 0 : index
    %c0_0 = arith.constant 0 : index
    %0 = vector.load %arg3[%c0, %c0_0] : memref<24x17xf32, #tpu.memory_space<vmem>>, vector<24x17xf32>
    %c0_1 = arith.constant 0 : index
    %c0_2 = arith.constant 0 : index
    %1 = vector.load %arg1[%c0_1, %c0_2] : memref<8x128xf32, #tpu.memory_space<vmem>>, vector<8x128xf32>
    %cst = arith.constant 0.000000e+00 : f32
    %2 = vector.broadcast %cst : f32 to vector<1x128xf32>
    %c0_i32 = arith.constant 0 : i32
    %3 = arith.index_cast %c0_i32 : i32 to index
    %c0_3 = arith.constant 0 : index
    %c0_4 = arith.constant 0 : index
    %4 = vector.load %arg2[%3, %c0_3, %c0_4] : memref<3x128x17xf32, #tpu.memory_space<vmem>>, vector<1x128x17xf32>
    %5 = vector.shape_cast %4 : vector<1x128x17xf32> to vector<128x17xf32>
    %cst_5 = arith.constant dense<0.000000e+00> : vector<24x128xf32>
    %6 = tpu.matmul %0, %5, %cst_5 {dimension_numbers = #tpu.dot_dimension_numbers<[1], [1], [0], [0], [0, 0, 1, 0], [], []>, precision = #tpu.contract_precision<fp32>} : vector<24x17xf32>, vector<128x17xf32>, vector<24x128xf32> -> vector<24x128xf32>
    %7 = vector.extract_strided_slice %6 {offsets = [0, 0], sizes = [1, 128], strides = [1, 1]} : vector<24x128xf32> to vector<1x128xf32>
    %8 = vector.extract_strided_slice %6 {offsets = [8, 0], sizes = [8, 128], strides = [1, 1]} : vector<24x128xf32> to vector<8x128xf32>
    %9 = vector.extract_strided_slice %6 {offsets = [16, 0], sizes = [8, 128], strides = [1, 1]} : vector<24x128xf32> to vector<8x128xf32>
    %10 = arith.mulf %1, %8 : vector<8x128xf32>
    %cst_6 = arith.constant dense<0.000000e+00> : vector<128xf32>
    %11 = vector.multi_reduction <add>, %10, %cst_6 [0] : vector<8x128xf32> to vector<128xf32>
    %12 = vector.shape_cast %11 : vector<128xf32> to vector<1x128xf32>
    %13 = arith.addf %12, %7 : vector<1x128xf32>
    %14 = math.tanh %13 : vector<1x128xf32>
    %15 = vector.broadcast %14 : vector<1x128xf32> to vector<8x128xf32>
    %16 = arith.mulf %9, %15 : vector<8x128xf32>
    %17 = arith.addf %1, %16 : vector<8x128xf32>
    %18 = arith.mulf %8, %9 : vector<8x128xf32>
    %cst_7 = arith.constant dense<0.000000e+00> : vector<128xf32>
    %19 = vector.multi_reduction <add>, %18, %cst_7 [0] : vector<8x128xf32> to vector<128xf32>
    %20 = vector.shape_cast %19 : vector<128xf32> to vector<1x128xf32>
    %21 = arith.mulf %14, %14 : vector<1x128xf32>
    %cst_8 = arith.constant 1.000000e+00 : f32
    %22 = vector.broadcast %cst_8 : f32 to vector<1x128xf32>
    %23 = arith.subf %22, %21 : vector<1x128xf32>
    %24 = arith.mulf %23, %20 : vector<1x128xf32>
    %cst_9 = arith.constant 1.000000e+00 : f32
    %25 = vector.broadcast %cst_9 : f32 to vector<1x128xf32>
    %26 = arith.addf %25, %24 : vector<1x128xf32>
    %27 = math.absf %26 : vector<1x128xf32>
    %28 = math.log %27 : vector<1x128xf32>
    %29 = arith.addf %2, %28 : vector<1x128xf32>
    %c1_i32 = arith.constant 1 : i32
    %30 = arith.index_cast %c1_i32 : i32 to index
    %c0_10 = arith.constant 0 : index
    %c0_11 = arith.constant 0 : index
    %31 = vector.load %arg2[%30, %c0_10, %c0_11] : memref<3x128x17xf32, #tpu.memory_space<vmem>>, vector<1x128x17xf32>
    %32 = vector.shape_cast %31 : vector<1x128x17xf32> to vector<128x17xf32>
    %cst_12 = arith.constant dense<0.000000e+00> : vector<24x128xf32>
    %33 = tpu.matmul %0, %32, %cst_12 {dimension_numbers = #tpu.dot_dimension_numbers<[1], [1], [0], [0], [0, 0, 1, 0], [], []>, precision = #tpu.contract_precision<fp32>} : vector<24x17xf32>, vector<128x17xf32>, vector<24x128xf32> -> vector<24x128xf32>
    %34 = vector.extract_strided_slice %33 {offsets = [0, 0], sizes = [1, 128], strides = [1, 1]} : vector<24x128xf32> to vector<1x128xf32>
    %35 = vector.extract_strided_slice %33 {offsets = [8, 0], sizes = [8, 128], strides = [1, 1]} : vector<24x128xf32> to vector<8x128xf32>
    %36 = vector.extract_strided_slice %33 {offsets = [16, 0], sizes = [8, 128], strides = [1, 1]} : vector<24x128xf32> to vector<8x128xf32>
    %37 = arith.mulf %17, %35 : vector<8x128xf32>
    %cst_13 = arith.constant dense<0.000000e+00> : vector<128xf32>
    %38 = vector.multi_reduction <add>, %37, %cst_13 [0] : vector<8x128xf32> to vector<128xf32>
    %39 = vector.shape_cast %38 : vector<128xf32> to vector<1x128xf32>
    %40 = arith.addf %39, %34 : vector<1x128xf32>
    %41 = math.tanh %40 : vector<1x128xf32>
    %42 = vector.broadcast %41 : vector<1x128xf32> to vector<8x128xf32>
    %43 = arith.mulf %36, %42 : vector<8x128xf32>
    %44 = arith.addf %17, %43 : vector<8x128xf32>
    %45 = arith.mulf %35, %36 : vector<8x128xf32>
    %cst_14 = arith.constant dense<0.000000e+00> : vector<128xf32>
    %46 = vector.multi_reduction <add>, %45, %cst_14 [0] : vector<8x128xf32> to vector<128xf32>
    %47 = vector.shape_cast %46 : vector<128xf32> to vector<1x128xf32>
    %48 = arith.mulf %41, %41 : vector<1x128xf32>
    %cst_15 = arith.constant 1.000000e+00 : f32
    %49 = vector.broadcast %cst_15 : f32 to vector<1x128xf32>
    %50 = arith.subf %49, %48 : vector<1x128xf32>
    %51 = arith.mulf %50, %47 : vector<1x128xf32>
    %cst_16 = arith.constant 1.000000e+00 : f32
    %52 = vector.broadcast %cst_16 : f32 to vector<1x128xf32>
    %53 = arith.addf %52, %51 : vector<1x128xf32>
    %54 = math.absf %53 : vector<1x128xf32>
    %55 = math.log %54 : vector<1x128xf32>
    %56 = arith.addf %29, %55 : vector<1x128xf32>
    %c2_i32 = arith.constant 2 : i32
    %57 = arith.index_cast %c2_i32 : i32 to index
    %c0_17 = arith.constant 0 : index
    %c0_18 = arith.constant 0 : index
    %58 = vector.load %arg2[%57, %c0_17, %c0_18] : memref<3x128x17xf32, #tpu.memory_space<vmem>>, vector<1x128x17xf32>
    %59 = vector.shape_cast %58 : vector<1x128x17xf32> to vector<128x17xf32>
    %cst_19 = arith.constant dense<0.000000e+00> : vector<24x128xf32>
    %60 = tpu.matmul %0, %59, %cst_19 {dimension_numbers = #tpu.dot_dimension_numbers<[1], [1], [0], [0], [0, 0, 1, 0], [], []>, precision = #tpu.contract_precision<fp32>} : vector<24x17xf32>, vector<128x17xf32>, vector<24x128xf32> -> vector<24x128xf32>
    %61 = vector.extract_strided_slice %60 {offsets = [0, 0], sizes = [1, 128], strides = [1, 1]} : vector<24x128xf32> to vector<1x128xf32>
    %62 = vector.extract_strided_slice %60 {offsets = [8, 0], sizes = [8, 128], strides = [1, 1]} : vector<24x128xf32> to vector<8x128xf32>
    %63 = vector.extract_strided_slice %60 {offsets = [16, 0], sizes = [8, 128], strides = [1, 1]} : vector<24x128xf32> to vector<8x128xf32>
    %64 = arith.mulf %44, %62 : vector<8x128xf32>
    %cst_20 = arith.constant dense<0.000000e+00> : vector<128xf32>
    %65 = vector.multi_reduction <add>, %64, %cst_20 [0] : vector<8x128xf32> to vector<128xf32>
    %66 = vector.shape_cast %65 : vector<128xf32> to vector<1x128xf32>
    %67 = arith.addf %66, %61 : vector<1x128xf32>
    %68 = math.tanh %67 : vector<1x128xf32>
    %69 = vector.broadcast %68 : vector<1x128xf32> to vector<8x128xf32>
    %70 = arith.mulf %63, %69 : vector<8x128xf32>
    %71 = arith.addf %44, %70 : vector<8x128xf32>
    %72 = arith.mulf %62, %63 : vector<8x128xf32>
    %cst_21 = arith.constant dense<0.000000e+00> : vector<128xf32>
    %73 = vector.multi_reduction <add>, %72, %cst_21 [0] : vector<8x128xf32> to vector<128xf32>
    %74 = vector.shape_cast %73 : vector<128xf32> to vector<1x128xf32>
    %75 = arith.mulf %68, %68 : vector<1x128xf32>
    %cst_22 = arith.constant 1.000000e+00 : f32
    %76 = vector.broadcast %cst_22 : f32 to vector<1x128xf32>
    %77 = arith.subf %76, %75 : vector<1x128xf32>
    %78 = arith.mulf %77, %74 : vector<1x128xf32>
    %cst_23 = arith.constant 1.000000e+00 : f32
    %79 = vector.broadcast %cst_23 : f32 to vector<1x128xf32>
    %80 = arith.addf %79, %78 : vector<1x128xf32>
    %81 = math.absf %80 : vector<1x128xf32>
    %82 = math.log %81 : vector<1x128xf32>
    %83 = arith.addf %56, %82 : vector<1x128xf32>
    %c3_i32 = arith.constant 3 : i32
    %c0_24 = arith.constant 0 : index
    %c0_25 = arith.constant 0 : index
    %84 = vector.load %arg4[%c0_24, %c0_25] : memref<8x128xf32, #tpu.memory_space<vmem>>, vector<8x128xf32>
    tpu.vector_store %arg4[%c0_24, %c0_25], %71 {strides = array<i32>} : memref<8x128xf32, #tpu.memory_space<vmem>>, vector<8x128xf32>,
    %c0_26 = arith.constant 0 : index
    %c0_27 = arith.constant 0 : index
    %85 = vector.load %arg5[%c0_26, %c0_27] : memref<1x128xf32, #tpu.memory_space<vmem>>, vector<1x128xf32>
    tpu.vector_store %arg5[%c0_26, %c0_27], %83 {strides = array<i32>} : memref<1x128xf32, #tpu.memory_space<vmem>>, vector<1x128xf32>,
    return
  }
  func.func @transform_0(%arg0: i32) -> (i32, i32) {
    %c0_i32 = arith.constant 0 : i32
    %c0_i32_0 = arith.constant 0 : i32
    return %c0_i32, %arg0 : i32, i32
  }
  func.func @transform_1(%arg0: i32) -> (i32, i32, i32) {
    %c0_i32 = arith.constant 0 : i32
    %c0_i32_0 = arith.constant 0 : i32
    %c0_i32_1 = arith.constant 0 : i32
    return %c0_i32, %arg0, %c0_i32_0 : i32, i32, i32
  }
  func.func @transform_2(%arg0: i32) -> (i32, i32) {
    %c0_i32 = arith.constant 0 : i32
    %c0_i32_0 = arith.constant 0 : i32
    %c0_i32_1 = arith.constant 0 : i32
    return %c0_i32, %c0_i32_0 : i32, i32
  }
  func.func @transform_3(%arg0: i32) -> (i32, i32) {
    %c0_i32 = arith.constant 0 : i32
    %c0_i32_0 = arith.constant 0 : i32
    return %c0_i32, %arg0 : i32, i32
  }
  func.func @transform_4(%arg0: i32) -> (i32, i32) {
    %c0_i32 = arith.constant 0 : i32
    %c0_i32_0 = arith.constant 0 : i32
    return %c0_i32, %arg0 : i32, i32
  }
}

</mosaic_0001>

<llo_original>
// kernel: tpu_custom_call.1
$region0: #{tpu_custom_call.1}
  #allocation0 [shape = 'u32[]', space=smem, size = 0x4, offset = 0x4, fixed_abs, tag = 'smem constant byte address 0x4 - core index']
  #allocation1 [shape = 'u32[144,128]{1,0:T(1,128)}', space=vmem, size = 0x12000, scoped, tag = 'internal scratch']
  %s0 = inlined_call_operand.hbm [shape: f32[8,128], index: 0, kind: input, shape index: {}, may-alias: {0,3}]
  %s1 = inlined_call_operand.vmem [shape: f32[3,128,17], index: 1, kind: input, shape index: {}]
  %s2 = inlined_call_operand.vmem [shape: f32[24,17], index: 2, kind: input, shape index: {}]
  %s3 = inlined_call_operand.hbm [shape: f32[8,128], index: 3, kind: output, shape index: {0}, may-alias: {0,3}]
  %s4 = inlined_call_operand.hbm [shape: f32[1,128], index: 4, kind: output, shape index: {1}]
  %5 = xla_tuple %s3, %s4
  %s6 = sld [smem:[#allocation0]]
  $region34: #{tpu_custom_call.1} parent=0
    _
  %s8 = ssub.s32 1, %s6
  %s9 = scalar_select 0, %s8, %s6
  $region1: #{tpu_custom_call.1} parent=0
    #allocation2 [shape = 'u8[4096]{0}', space=vmem, size = 0x1000, scoped, tag = 'input window, operand 0, single buffered']
    #allocation3 [shape = 's32[1]{0}', space=sflag, size = 0x4, scoped, tag = 'scoped memory for tpu_custom_call.1']
    #allocation4 [shape = 's32[1]{0}', space=sflag, size = 0x4, scoped, tag = 'scoped memory for tpu_custom_call.1']
    #allocation5 [shape = 'u8[4096]{0}', space=vmem, size = 0x1000, scoped, tag = 'output window, operand 0, single buffered']
    #allocation6 [shape = 'u8[512]{0}', space=vmem, size = 0x400, scoped, tag = 'output window, operand 1, single buffered']
    #allocation7 [shape = 's32[1]{0}', space=sflag, size = 0x4, scoped, tag = 'scoped memory for tpu_custom_call.1']
    %10 = vsyncpa [#allocation3], 0
    %11 = vsyncpa [#allocation4], 0
    %12 = vsyncpa [#allocation7], 0
    // Predicated region
    $region2: #{tpu_custom_call.1} parent=1 // pred_check
      _
    $region3: #{tpu_custom_call.1} parent=1 // pred_check_branch
      %14 = sbr.rel (0) target = $region5
    $region4: #{tpu_custom_call.1} parent=1 // pred_region
      %s16 = ssub.s32 128, 128
      %17 = vsyncadd [#allocation3], %s16
      %s19 = sshll.u32 [#allocation2], 4
      %s20 = int_to_ptr.vmem [resolvable:$true] %s19
      %22 = dma.hbm_to_vmem [thread:$0]  %s0, 128, %s20, [#allocation3]
    $region5: #{tpu_custom_call.1} parent=1 // pred_fallthru
      _
    // Predicated region
    $region6: #{tpu_custom_call.1} parent=1 // pred_check
      _
    $region7: #{tpu_custom_call.1} parent=1 // pred_check_branch
      %24 = sbr.rel (0) target = $region9
    $region8: #{tpu_custom_call.1} parent=1 // pred_region
      _
    $region9: #{tpu_custom_call.1} parent=1 // pred_fallthru
      _
    // Predicated region
    $region10: #{tpu_custom_call.1} parent=1 // pred_check
      _
    $region11: #{tpu_custom_call.1} parent=1 // pred_check_branch
      %26 = sbr.rel (0) target = $region13
    $region12: #{tpu_custom_call.1} parent=1 // pred_region
      _
    $region13: #{tpu_custom_call.1} parent=1 // pred_fallthru
      _
    // Predicated region
    $region14: #{tpu_custom_call.1} parent=1 // pred_check
      _
    $region15: #{tpu_custom_call.1} parent=1 // pred_check_branch
      %28 = sbr.rel (0) target = $region17
    $region16: #{tpu_custom_call.1} parent=1 // pred_region
      %29 = dma.done [#allocation3], 128
    $region17: #{tpu_custom_call.1} parent=1 // pred_fallthru
      _
    %v30 = vld [vmem:[%s2] sm:$0xff]
    %v31 = vld [vmem:[%s2 + $0x8] sm:$0xff]
    %v32 = vld [vmem:[%s2 + $0x10] sm:$0xff]
    %v33 = vld [vmem:[#allocation2] sm:$0xff]
    %v34 = vld [vmem:[%s1] sm:$0xff]
    %v35 = vld [vmem:[%s1 + $0x8] sm:$0xff]
    %v36 = vld [vmem:[%s1 + $0x10] sm:$0xff]
    %v37 = vld [vmem:[%s1 + $0x18] sm:$0xff]
    %v38 = vld [vmem:[%s1 + $0x20] sm:$0xff]
    %v39 = vld [vmem:[%s1 + $0x28] sm:$0xff]
    %v40 = vld [vmem:[%s1 + $0x30] sm:$0xff]
    %v41 = vld [vmem:[%s1 + $0x38] sm:$0xff]
    %v42 = vld [vmem:[%s1 + $0x40] sm:$0xff]
    %v43 = vld [vmem:[%s1 + $0x48] sm:$0xff]
    %v44 = vld [vmem:[%s1 + $0x50] sm:$0xff]
    %v45 = vld [vmem:[%s1 + $0x58] sm:$0xff]
    %v46 = vld [vmem:[%s1 + $0x60] sm:$0xff]
    %v47 = vld [vmem:[%s1 + $0x68] sm:$0xff]
    %v48 = vld [vmem:[%s1 + $0x70] sm:$0xff]
    %v49 = vld [vmem:[%s1 + $0x78] sm:$0xff]
    %vm50 = vcmask 138240
    %v52 = vsel %vm50, %v30, 0
    %v55 = vsel %vm50, %v31, 0
    %v58 = vsel %vm50, %v32, 0
    %v61 = vsel %vm50, %v34, 0
    %v64 = vsel %vm50, %v35, 0
    %v67 = vsel %vm50, %v36, 0
    %v70 = vsel %vm50, %v37, 0
    %v73 = vsel %vm50, %v38, 0
    %v76 = vsel %vm50, %v39, 0
    %v79 = vsel %vm50, %v40, 0
    %v82 = vsel %vm50, %v41, 0
    %v85 = vsel %vm50, %v42, 0
    %v88 = vsel %vm50, %v43, 0
    %v91 = vsel %vm50, %v44, 0
    %v94 = vsel %vm50, %v45, 0
    %v97 = vsel %vm50, %v46, 0
    %v100 = vsel %vm50, %v47, 0
    %v103 = vsel %vm50, %v48, 0
    %v106 = vsel %vm50, %v49, 0
    %108 = vmatprep.subr.mxu0 0.0
    %v109 = vand.u32 %v106, 4294901760
    %110 = vmatpush1.xpose.msra.mxu0 %v109
    %111 = vmatprep.subr.mxu0 0.0
    %v112 = vand.u32 %v103, 4294901760
    %113 = vmatpush1.xpose.msra.mxu0 %v112
    %114 = vmatprep.subr.mxu0 0.0
    %v115 = vand.u32 %v100, 4294901760
    %116 = vmatpush1.xpose.msra.mxu0 %v115
    %117 = vmatprep.subr.mxu0 0.0
    %v118 = vand.u32 %v97, 4294901760
    %119 = vmatpush1.xpose.msra.mxu0 %v118
    %120 = vmatprep.subr.mxu0 0.0
    %v121 = vand.u32 %v94, 4294901760
    %122 = vmatpush1.xpose.msra.mxu0 %v121
    %123 = vmatprep.subr.mxu0 0.0
    %v124 = vand.u32 %v91, 4294901760
    %125 = vmatpush1.xpose.msra.mxu0 %v124
    %126 = vmatprep.subr.mxu0 0.0
    %v127 = vand.u32 %v88, 4294901760
    %128 = vmatpush1.xpose.msra.mxu0 %v127
    %129 = vmatprep.subr.mxu0 0.0
    %v130 = vand.u32 %v85, 4294901760
    %131 = vmatpush1.xpose.msra.mxu0 %v130
    %132 = vmatprep.subr.mxu0 0.0
    %v133 = vand.u32 %v82, 4294901760
    %134 = vmatpush1.xpose.msra.mxu0 %v133
    %135 = vmatprep.subr.mxu0 0.0
    %v136 = vand.u32 %v79, 4294901760
    %137 = vmatpush1.xpose.msra.mxu0 %v136
    %138 = vmatprep.subr.mxu0 0.0
    %v139 = vand.u32 %v76, 4294901760
    %140 = vmatpush1.xpose.msra.mxu0 %v139
    %141 = vmatprep.subr.mxu0 0.0
    %v142 = vand.u32 %v73, 4294901760
    %143 = vmatpush1.xpose.msra.mxu0 %v142
    %144 = vmatprep.subr.mxu0 0.0
    %v145 = vand.u32 %v70, 4294901760
    %146 = vmatpush1.xpose.msra.mxu0 %v145
    %147 = vmatprep.subr.mxu0 0.0
    %v148 = vand.u32 %v67, 4294901760
    %149 = vmatpush1.xpose.msra.mxu0 %v148
    %150 = vmatprep.subr.mxu0 0.0
    %v151 = vand.u32 %v64, 4294901760
    %152 = vmatpush1.xpose.msra.mxu0 %v151
    %153 = vmatprep.subr.mxu0 0.0
    %v154 = vand.u32 %v61, 4294901760
    %155 = vmatpush1.xpose.msra.mxu0 %v154
    %156 = vmatprep.subr.mxu0 0.0
    %157 = vmatpush2.xpose.msra.mxu0 0.0
    %158 = vmatprep.subr.mxu0 0.0
    %159 = vmatpush2.xpose.msra.mxu0 0.0
    %160 = vmatprep.subr.mxu0 0.0
    %161 = vmatpush2.xpose.msra.mxu0 0.0
    %162 = vmatprep.subr.mxu0 0.0
    %163 = vmatpush2.xpose.msra.mxu0 0.0
    %164 = vmatprep.subr.mxu0 0.0
    %165 = vmatpush2.xpose.msra.mxu0 0.0
    %166 = vmatprep.subr.mxu0 0.0
    %167 = vmatpush2.xpose.msra.mxu0 0.0
    %168 = vmatprep.subr.mxu0 0.0
    %169 = vmatpush2.xpose.msra.mxu0 0.0
    %170 = vmatprep.subr.mxu0 0.0
    %171 = vmatpush2.xpose.msra.mxu0 0.0
    %172 = vmatprep.subr.mxu0 0.0
    %173 = vmatpush2.xpose.msra.mxu0 0.0
    %174 = vmatprep.subr.mxu0 0.0
    %175 = vmatpush2.xpose.msra.mxu0 0.0
    %176 = vmatprep.subr.mxu0 0.0
    %177 = vmatpush2.xpose.msra.mxu0 0.0
    %178 = vmatprep.subr.mxu0 0.0
    %179 = vmatpush2.xpose.msra.mxu0 0.0
    %180 = vmatprep.subr.mxu0 0.0
    %181 = vmatpush2.xpose.msra.mxu0 0.0
    %182 = vmatprep.subr.mxu0 0.0
    %183 = vmatpush2.xpose.msra.mxu0 0.0
    %184 = vmatprep.subr.mxu0 0.0
    %185 = vmatpush2.xpose.msra.mxu0 0.0
    %186 = vmatprep.subr.mxu0 0.0
    %187 = vmatpush2.xpose.msra.mxu0 0.0
    %188 = vmatprep.mubr.f32.mxu0 0.0
    %v189 = vand.u32 %v52, 4294901760
    %v190 = vsub.f32 %v52, %v189
    %v191 = vand.u32 %v190, 4294901760
    %v192 = vsub.f32 %v190, %v191
    %v193 = vand.u32 %v192, 4294901760
    %194 = vmatmul.mubr.f32.gmra.mxu0 %v193
    %v195 = vpop.f32.mrf.mxu0
    %v196 = vadd.f32 0.0, %v195
    %v197 = vpop.f32.mrf.mxu0
    %198 = vmatprep.mubr.f32.mxu0 0.0
    %v199 = vand.u32 %v55, 4294901760
    %v200 = vsub.f32 %v55, %v199
    %v201 = vand.u32 %v200, 4294901760
    %v202 = vsub.f32 %v200, %v201
    %v203 = vand.u32 %v202, 4294901760
    %204 = vmatmul.mubr.f32.gmra.mxu0 %v203
    %v205 = vpop.f32.mrf.mxu0
    %v206 = vadd.f32 0.0, %v205
    %v207 = vpop.f32.mrf.mxu0
    %208 = vmatprep.mubr.f32.mxu0 0.0
    %v209 = vand.u32 %v58, 4294901760
    %v210 = vsub.f32 %v58, %v209
    %v211 = vand.u32 %v210, 4294901760
    %v212 = vsub.f32 %v210, %v211
    %v213 = vand.u32 %v212, 4294901760
    %214 = vmatmul.mubr.f32.gmra.mxu0 %v213
    %v215 = vpop.f32.mrf.mxu0
    %v216 = vadd.f32 0.0, %v215
    %v217 = vpop.f32.mrf.mxu0
    %218 = vdwg.mxu0
    %219 = vmatprep.subr.mxu0 0.0
    %v220 = vand.u32 %v106, 4294901760
    %v221 = vsub.f32 %v106, %v220
    %v222 = vand.u32 %v221, 4294901760
    %v223 = vsub.f32 %v221, %v222
    %v224 = vand.u32 %v223, 4294901760
    %225 = vmatpush1.xpose.msra.mxu0 %v224
    %226 = vmatprep.subr.mxu0 0.0
    %v227 = vand.u32 %v103, 4294901760
    %v228 = vsub.f32 %v103, %v227
    %v229 = vand.u32 %v228, 4294901760
    %v230 = vsub.f32 %v228, %v229
    %v231 = vand.u32 %v230, 4294901760
    %232 = vmatpush1.xpose.msra.mxu0 %v231
    %233 = vmatprep.subr.mxu0 0.0
    %v234 = vand.u32 %v100, 4294901760
    %v235 = vsub.f32 %v100, %v234
    %v236 = vand.u32 %v235, 4294901760
    %v237 = vsub.f32 %v235, %v236
    %v238 = vand.u32 %v237, 4294901760
    %239 = vmatpush1.xpose.msra.mxu0 %v238
    %240 = vmatprep.subr.mxu0 0.0
    %v241 = vand.u32 %v97, 4294901760
    %v242 = vsub.f32 %v97, %v241
    %v243 = vand.u32 %v242, 4294901760
    %v244 = vsub.f32 %v242, %v243
    %v245 = vand.u32 %v244, 4294901760
    %246 = vmatpush1.xpose.msra.mxu0 %v245
    %247 = vmatprep.subr.mxu0 0.0
    %v248 = vand.u32 %v94, 4294901760
    %v249 = vsub.f32 %v94, %v248
    %v250 = vand.u32 %v249, 4294901760
    %v251 = vsub.f32 %v249, %v250
    %v252 = vand.u32 %v251, 4294901760
    %253 = vmatpush1.xpose.msra.mxu0 %v252
    %254 = vmatprep.subr.mxu0 0.0
    %v255 = vand.u32 %v91, 4294901760
    %v256 = vsub.f32 %v91, %v255
    %v257 = vand.u32 %v256, 4294901760
    %v258 = vsub.f32 %v256, %v257
    %v259 = vand.u32 %v258, 4294901760
    %260 = vmatpush1.xpose.msra.mxu0 %v259
    %261 = vmatprep.subr.mxu0 0.0
    %v262 = vand.u32 %v88, 4294901760
    %v263 = vsub.f32 %v88, %v262
    %v264 = vand.u32 %v263, 4294901760
    %v265 = vsub.f32 %v263, %v264
    %v266 = vand.u32 %v265, 4294901760
    %267 = vmatpush1.xpose.msra.mxu0 %v266
    %268 = vmatprep.subr.mxu0 0.0
    %v269 = vand.u32 %v85, 4294901760
    %v270 = vsub.f32 %v85, %v269
    %v271 = vand.u32 %v270, 4294901760
    %v272 = vsub.f32 %v270, %v271
    %v273 = vand.u32 %v272, 4294901760
    %274 = vmatpush1.xpose.msra.mxu0 %v273
    %275 = vmatprep.subr.mxu0 0.0
    %v276 = vand.u32 %v82, 4294901760
    %v277 = vsub.f32 %v82, %v276
    %v278 = vand.u32 %v277, 4294901760
    %v279 = vsub.f32 %v277, %v278
    %v280 = vand.u32 %v279, 4294901760
    %281 = vmatpush1.xpose.msra.mxu0 %v280
    %282 = vmatprep.subr.mxu0 0.0
    %v283 = vand.u32 %v79, 4294901760
    %v284 = vsub.f32 %v79, %v283
    %v285 = vand.u32 %v284, 4294901760
    %v286 = vsub.f32 %v284, %v285
    %v287 = vand.u32 %v286, 4294901760
    %288 = vmatpush1.xpose.msra.mxu0 %v287
    %289 = vmatprep.subr.mxu0 0.0
    %v290 = vand.u32 %v76, 4294901760
    %v291 = vsub.f32 %v76, %v290
    %v292 = vand.u32 %v291, 4294901760
    %v293 = vsub.f32 %v291, %v292
    %v294 = vand.u32 %v293, 4294901760
    %295 = vmatpush1.xpose.msra.mxu0 %v294
    %296 = vmatprep.subr.mxu0 0.0
    %v297 = vand.u32 %v73, 4294901760
    %v298 = vsub.f32 %v73, %v297
    %v299 = vand.u32 %v298, 4294901760
    %v300 = vsub.f32 %v298, %v299
    %v301 = vand.u32 %v300, 4294901760
    %302 = vmatpush1.xpose.msra.mxu0 %v301
    %303 = vmatprep.subr.mxu0 0.0
    %v304 = vand.u32 %v70, 4294901760
    %v305 = vsub.f32 %v70, %v304
    %v306 = vand.u32 %v305, 4294901760
    %v307 = vsub.f32 %v305, %v306
    %v308 = vand.u32 %v307, 4294901760
    %309 = vmatpush1.xpose.msra.mxu0 %v308
    %310 = vmatprep.subr.mxu0 0.0
    %v311 = vand.u32 %v67, 4294901760
    %v312 = vsub.f32 %v67, %v311
    %v313 = vand.u32 %v312, 4294901760
    %v314 = vsub.f32 %v312, %v313
    %v315 = vand.u32 %v314, 4294901760
    %316 = vmatpush1.xpose.msra.mxu0 %v315
    %317 = vmatprep.subr.mxu0 0.0
    %v318 = vand.u32 %v64, 4294901760
    %v319 = vsub.f32 %v64, %v318
    %v320 = vand.u32 %v319, 4294901760
    %v321 = vsub.f32 %v319, %v320
    %v322 = vand.u32 %v321, 4294901760
    %323 = vmatpush1.xpose.msra.mxu0 %v322
    %324 = vmatprep.subr.mxu0 0.0
    %v325 = vand.u32 %v61, 4294901760
    %v326 = vsub.f32 %v61, %v325
    %v327 = vand.u32 %v326, 4294901760
    %v328 = vsub.f32 %v326, %v327
    %v329 = vand.u32 %v328, 4294901760
    %330 = vmatpush1.xpose.msra.mxu0 %v329
    %331 = vmatprep.subr.mxu0 0.0
    %332 = vmatpush2.xpose.msra.mxu0 0.0
    %333 = vmatprep.subr.mxu0 0.0
    %334 = vmatpush2.xpose.msra.mxu0 0.0
    %335 = vmatprep.subr.mxu0 0.0
    %336 = vmatpush2.xpose.msra.mxu0 0.0
    %337 = vmatprep.subr.mxu0 0.0
    %338 = vmatpush2.xpose.msra.mxu0 0.0
    %339 = vmatprep.subr.mxu0 0.0
    %340 = vmatpush2.xpose.msra.mxu0 0.0
    %341 = vmatprep.subr.mxu0 0.0
    %342 = vmatpush2.xpose.msra.mxu0 0.0
    %343 = vmatprep.subr.mxu0 0.0
    %344 = vmatpush2.xpose.msra.mxu0 0.0
    %345 = vmatprep.subr.mxu0 0.0
    %346 = vmatpush2.xpose.msra.mxu0 0.0
    %347 = vmatprep.subr.mxu0 0.0
    %348 = vmatpush2.xpose.msra.mxu0 0.0
    %349 = vmatprep.subr.mxu0 0.0
    %350 = vmatpush2.xpose.msra.mxu0 0.0
    %351 = vmatprep.subr.mxu0 0.0
    %352 = vmatpush2.xpose.msra.mxu0 0.0
    %353 = vmatprep.subr.mxu0 0.0
    %354 = vmatpush2.xpose.msra.mxu0 0.0
    %355 = vmatprep.subr.mxu0 0.0
    %356 = vmatpush2.xpose.msra.mxu0 0.0
    %357 = vmatprep.subr.mxu0 0.0
    %358 = vmatpush2.xpose.msra.mxu0 0.0
    %359 = vmatprep.subr.mxu0 0.0
    %360 = vmatpush2.xpose.msra.mxu0 0.0
    %361 = vmatprep.subr.mxu0 0.0
    %362 = vmatpush2.xpose.msra.mxu0 0.0
    %363 = vmatprep.mubr.f32.mxu0 0.0
    %v364 = vand.u32 %v52, 4294901760
    %365 = vmatmul.mubr.f32.gmra.mxu0 %v364
    %v366 = vpop.f32.mrf.mxu0
    %v367 = vadd.f32 %v196, %v366
    %v368 = vpop.f32.mrf.mxu0
    %369 = vmatprep.mubr.f32.mxu0 0.0
    %v370 = vand.u32 %v55, 4294901760
    %371 = vmatmul.mubr.f32.gmra.mxu0 %v370
    %v372 = vpop.f32.mrf.mxu0
    %v373 = vadd.f32 %v206, %v372
    %v374 = vpop.f32.mrf.mxu0
    %375 = vmatprep.mubr.f32.mxu0 0.0
    %v376 = vand.u32 %v58, 4294901760
    %377 = vmatmul.mubr.f32.gmra.mxu0 %v376
    %v378 = vpop.f32.mrf.mxu0
    %v379 = vadd.f32 %v216, %v378
    %v380 = vpop.f32.mrf.mxu0
    %381 = vdwg.mxu0
    %382 = vmatprep.subr.mxu0 0.0
    %v383 = vand.u32 %v106, 4294901760
    %v384 = vsub.f32 %v106, %v383
    %385 = vmatpush1.xpose.msra.mxu0 %v384
    %386 = vmatprep.subr.mxu0 0.0
    %v387 = vand.u32 %v103, 4294901760
    %v388 = vsub.f32 %v103, %v387
    %389 = vmatpush1.xpose.msra.mxu0 %v388
    %390 = vmatprep.subr.mxu0 0.0
    %v391 = vand.u32 %v100, 4294901760
    %v392 = vsub.f32 %v100, %v391
    %393 = vmatpush1.xpose.msra.mxu0 %v392
    %394 = vmatprep.subr.mxu0 0.0
    %v395 = vand.u32 %v97, 4294901760
    %v396 = vsub.f32 %v97, %v395
    %397 = vmatpush1.xpose.msra.mxu0 %v396
    %398 = vmatprep.subr.mxu0 0.0
    %v399 = vand.u32 %v94, 4294901760
    %v400 = vsub.f32 %v94, %v399
    %401 = vmatpush1.xpose.msra.mxu0 %v400
    %402 = vmatprep.subr.mxu0 0.0
    %v403 = vand.u32 %v91, 4294901760
    %v404 = vsub.f32 %v91, %v403
    %405 = vmatpush1.xpose.msra.mxu0 %v404
    %406 = vmatprep.subr.mxu0 0.0
    %v407 = vand.u32 %v88, 4294901760
    %v408 = vsub.f32 %v88, %v407
    %409 = vmatpush1.xpose.msra.mxu0 %v408
    %410 = vmatprep.subr.mxu0 0.0
    %v411 = vand.u32 %v85, 4294901760
    %v412 = vsub.f32 %v85, %v411
    %413 = vmatpush1.xpose.msra.mxu0 %v412
    %414 = vmatprep.subr.mxu0 0.0
    %v415 = vand.u32 %v82, 4294901760
    %v416 = vsub.f32 %v82, %v415
    %417 = vmatpush1.xpose.msra.mxu0 %v416
    %418 = vmatprep.subr.mxu0 0.0
    %v419 = vand.u32 %v79, 4294901760
    %v420 = vsub.f32 %v79, %v419
    %421 = vmatpush1.xpose.msra.mxu0 %v420
    %422 = vmatprep.subr.mxu0 0.0
    %v423 = vand.u32 %v76, 4294901760
    %v424 = vsub.f32 %v76, %v423
    %425 = vmatpush1.xpose.msra.mxu0 %v424
    %426 = vmatprep.subr.mxu0 0.0
    %v427 = vand.u32 %v73, 4294901760
    %v428 = vsub.f32 %v73, %v427
    %429 = vmatpush1.xpose.msra.mxu0 %v428
    %430 = vmatprep.subr.mxu0 0.0
    %v431 = vand.u32 %v70, 4294901760
    %v432 = vsub.f32 %v70, %v431
    %433 = vmatpush1.xpose.msra.mxu0 %v432
    %434 = vmatprep.subr.mxu0 0.0
    %v435 = vand.u32 %v67, 4294901760
    %v436 = vsub.f32 %v67, %v435
    %437 = vmatpush1.xpose.msra.mxu0 %v436
    %438 = vmatprep.subr.mxu0 0.0
    %v439 = vand.u32 %v64, 4294901760
    %v440 = vsub.f32 %v64, %v439
    %441 = vmatpush1.xpose.msra.mxu0 %v440
    %442 = vmatprep.subr.mxu0 0.0
    %v443 = vand.u32 %v61, 4294901760
    %v444 = vsub.f32 %v61, %v443
    %445 = vmatpush1.xpose.msra.mxu0 %v444
    %446 = vmatprep.subr.mxu0 0.0
    %447 = vmatpush2.xpose.msra.mxu0 0.0
    %448 = vmatprep.subr.mxu0 0.0
    %449 = vmatpush2.xpose.msra.mxu0 0.0
    %450 = vmatprep.subr.mxu0 0.0
    %451 = vmatpush2.xpose.msra.mxu0 0.0
    %452 = vmatprep.subr.mxu0 0.0
    %453 = vmatpush2.xpose.msra.mxu0 0.0
    %454 = vmatprep.subr.mxu0 0.0
    %455 = vmatpush2.xpose.msra.mxu0 0.0
    %456 = vmatprep.subr.mxu0 0.0
    %457 = vmatpush2.xpose.msra.mxu0 0.0
    %458 = vmatprep.subr.mxu0 0.0
    %459 = vmatpush2.xpose.msra.mxu0 0.0
    %460 = vmatprep.subr.mxu0 0.0
    %461 = vmatpush2.xpose.msra.mxu0 0.0
    %462 = vmatprep.subr.mxu0 0.0
    %463 = vmatpush2.xpose.msra.mxu0 0.0
    %464 = vmatprep.subr.mxu0 0.0
    %465 = vmatpush2.xpose.msra.mxu0 0.0
    %466 = vmatprep.subr.mxu0 0.0
    %467 = vmatpush2.xpose.msra.mxu0 0.0
    %468 = vmatprep.subr.mxu0 0.0
    %469 = vmatpush2.xpose.msra.mxu0 0.0
    %470 = vmatprep.subr.mxu0 0.0
    %471 = vmatpush2.xpose.msra.mxu0 0.0
    %472 = vmatprep.subr.mxu0 0.0
    %473 = vmatpush2.xpose.msra.mxu0 0.0
    %474 = vmatprep.subr.mxu0 0.0
    %475 = vmatpush2.xpose.msra.mxu0 0.0
    %476 = vmatprep.subr.mxu0 0.0
    %477 = vmatpush2.xpose.msra.mxu0 0.0
    %478 = vmatprep.mubr.f32.mxu0 0.0
    %v479 = vand.u32 %v52, 4294901760
    %v480 = vsub.f32 %v52, %v479
    %481 = vmatmul.mubr.f32.gmra.mxu0 %v480
    %v482 = vpop.f32.mrf.mxu0
    %v483 = vadd.f32 %v367, %v482
    %v484 = vpop.f32.mrf.mxu0
    %485 = vmatprep.mubr.f32.mxu0 0.0
    %v486 = vand.u32 %v55, 4294901760
    %v487 = vsub.f32 %v55, %v486
    %488 = vmatmul.mubr.f32.gmra.mxu0 %v487
    %v489 = vpop.f32.mrf.mxu0
    %v490 = vadd.f32 %v373, %v489
    %v491 = vpop.f32.mrf.mxu0
    %492 = vmatprep.mubr.f32.mxu0 0.0
    %v493 = vand.u32 %v58, 4294901760
    %v494 = vsub.f32 %v58, %v493
    %495 = vmatmul.mubr.f32.gmra.mxu0 %v494
    %v496 = vpop.f32.mrf.mxu0
    %v497 = vadd.f32 %v379, %v496
    %v498 = vpop.f32.mrf.mxu0
    %499 = vdwg.mxu0
    %500 = vmatprep.subr.mxu0 0.0
    %v501 = vand.u32 %v106, 4294901760
    %502 = vmatpush1.xpose.msra.mxu0 %v501
    %503 = vmatprep.subr.mxu0 0.0
    %v504 = vand.u32 %v103, 4294901760
    %505 = vmatpush1.xpose.msra.mxu0 %v504
    %506 = vmatprep.subr.mxu0 0.0
    %v507 = vand.u32 %v100, 4294901760
    %508 = vmatpush1.xpose.msra.mxu0 %v507
    %509 = vmatprep.subr.mxu0 0.0
    %v510 = vand.u32 %v97, 4294901760
    %511 = vmatpush1.xpose.msra.mxu0 %v510
    %512 = vmatprep.subr.mxu0 0.0
    %v513 = vand.u32 %v94, 4294901760
    %514 = vmatpush1.xpose.msra.mxu0 %v513
    %515 = vmatprep.subr.mxu0 0.0
    %v516 = vand.u32 %v91, 4294901760
    %517 = vmatpush1.xpose.msra.mxu0 %v516
    %518 = vmatprep.subr.mxu0 0.0
    %v519 = vand.u32 %v88, 4294901760
    %520 = vmatpush1.xpose.msra.mxu0 %v519
    %521 = vmatprep.subr.mxu0 0.0
    %v522 = vand.u32 %v85, 4294901760
    %523 = vmatpush1.xpose.msra.mxu0 %v522
    %524 = vmatprep.subr.mxu0 0.0
    %v525 = vand.u32 %v82, 4294901760
    %526 = vmatpush1.xpose.msra.mxu0 %v525
    %527 = vmatprep.subr.mxu0 0.0
    %v528 = vand.u32 %v79, 4294901760
    %529 = vmatpush1.xpose.msra.mxu0 %v528
    %530 = vmatprep.subr.mxu0 0.0
    %v531 = vand.u32 %v76, 4294901760
    %532 = vmatpush1.xpose.msra.mxu0 %v531
    %533 = vmatprep.subr.mxu0 0.0
    %v534 = vand.u32 %v73, 4294901760
    %535 = vmatpush1.xpose.msra.mxu0 %v534
    %536 = vmatprep.subr.mxu0 0.0
    %v537 = vand.u32 %v70, 4294901760
    %538 = vmatpush1.xpose.msra.mxu0 %v537
    %539 = vmatprep.subr.mxu0 0.0
    %v540 = vand.u32 %v67, 4294901760
    %541 = vmatpush1.xpose.msra.mxu0 %v540
    %542 = vmatprep.subr.mxu0 0.0
    %v543 = vand.u32 %v64, 4294901760
    %544 = vmatpush1.xpose.msra.mxu0 %v543
    %545 = vmatprep.subr.mxu0 0.0
    %v546 = vand.u32 %v61, 4294901760
    %547 = vmatpush1.xpose.msra.mxu0 %v546
    %548 = vmatprep.subr.mxu0 0.0
    %549 = vmatpush2.xpose.msra.mxu0 0.0
    %550 = vmatprep.subr.mxu0 0.0
    %551 = vmatpush2.xpose.msra.mxu0 0.0
    %552 = vmatprep.subr.mxu0 0.0
    %553 = vmatpush2.xpose.msra.mxu0 0.0
    %554 = vmatprep.subr.mxu0 0.0
    %555 = vmatpush2.xpose.msra.mxu0 0.0
    %556 = vmatprep.subr.mxu0 0.0
    %557 = vmatpush2.xpose.msra.mxu0 0.0
    %558 = vmatprep.subr.mxu0 0.0
    %559 = vmatpush2.xpose.msra.mxu0 0.0
    %560 = vmatprep.subr.mxu0 0.0
    %561 = vmatpush2.xpose.msra.mxu0 0.0
    %562 = vmatprep.subr.mxu0 0.0
    %563 = vmatpush2.xpose.msra.mxu0 0.0
    %564 = vmatprep.subr.mxu0 0.0
    %565 = vmatpush2.xpose.msra.mxu0 0.0
    %566 = vmatprep.subr.mxu0 0.0
    %567 = vmatpush2.xpose.msra.mxu0 0.0
    %568 = vmatprep.subr.mxu0 0.0
    %569 = vmatpush2.xpose.msra.mxu0 0.0
    %570 = vmatprep.subr.mxu0 0.0
    %571 = vmatpush2.xpose.msra.mxu0 0.0
    %572 = vmatprep.subr.mxu0 0.0
    %573 = vmatpush2.xpose.msra.mxu0 0.0
    %574 = vmatprep.subr.mxu0 0.0
    %575 = vmatpush2.xpose.msra.mxu0 0.0
    %576 = vmatprep.subr.mxu0 0.0
    %577 = vmatpush2.xpose.msra.mxu0 0.0
    %578 = vmatprep.subr.mxu0 0.0
    %579 = vmatpush2.xpose.msra.mxu0 0.0
    %580 = vmatprep.mubr.f32.mxu0 0.0
    %v581 = vand.u32 %v52, 4294901760
    %v582 = vsub.f32 %v52, %v581
    %v583 = vand.u32 %v582, 4294901760
    %584 = vmatmul.mubr.f32.gmra.mxu0 %v583
    %v585 = vpop.f32.mrf.mxu0
    %v586 = vadd.f32 %v483, %v585
    %v587 = vpop.f32.mrf.mxu0
    %588 = vmatprep.mubr.f32.mxu0 0.0
    %v589 = vand.u32 %v55, 4294901760
    %v590 = vsub.f32 %v55, %v589
    %v591 = vand.u32 %v590, 4294901760
    %592 = vmatmul.mubr.f32.gmra.mxu0 %v591
    %v593 = vpop.f32.mrf.mxu0
    %v594 = vadd.f32 %v490, %v593
    %v595 = vpop.f32.mrf.mxu0
    %596 = vmatprep.mubr.f32.mxu0 0.0
    %v597 = vand.u32 %v58, 4294901760
    %v598 = vsub.f32 %v58, %v597
    %v599 = vand.u32 %v598, 4294901760
    %600 = vmatmul.mubr.f32.gmra.mxu0 %v599
    %v601 = vpop.f32.mrf.mxu0
    %v602 = vadd.f32 %v497, %v601
    %v603 = vpop.f32.mrf.mxu0
    %604 = vdwg.mxu0
    %605 = vmatprep.subr.mxu0 0.0
    %v606 = vand.u32 %v106, 4294901760
    %v607 = vsub.f32 %v106, %v606
    %v608 = vand.u32 %v607, 4294901760
    %609 = vmatpush1.xpose.msra.mxu0 %v608
    %610 = vmatprep.subr.mxu0 0.0
    %v611 = vand.u32 %v103, 4294901760
    %v612 = vsub.f32 %v103, %v611
    %v613 = vand.u32 %v612, 4294901760
    %614 = vmatpush1.xpose.msra.mxu0 %v613
    %615 = vmatprep.subr.mxu0 0.0
    %v616 = vand.u32 %v100, 4294901760
    %v617 = vsub.f32 %v100, %v616
    %v618 = vand.u32 %v617, 4294901760
    %619 = vmatpush1.xpose.msra.mxu0 %v618
    %620 = vmatprep.subr.mxu0 0.0
    %v621 = vand.u32 %v97, 4294901760
    %v622 = vsub.f32 %v97, %v621
    %v623 = vand.u32 %v622, 4294901760
    %624 = vmatpush1.xpose.msra.mxu0 %v623
    %625 = vmatprep.subr.mxu0 0.0
    %v626 = vand.u32 %v94, 4294901760
    %v627 = vsub.f32 %v94, %v626
    %v628 = vand.u32 %v627, 4294901760
    %629 = vmatpush1.xpose.msra.mxu0 %v628
    %630 = vmatprep.subr.mxu0 0.0
    %v631 = vand.u32 %v91, 4294901760
    %v632 = vsub.f32 %v91, %v631
    %v633 = vand.u32 %v632, 4294901760
    %634 = vmatpush1.xpose.msra.mxu0 %v633
    %635 = vmatprep.subr.mxu0 0.0
    %v636 = vand.u32 %v88, 4294901760
    %v637 = vsub.f32 %v88, %v636
    %v638 = vand.u32 %v637, 4294901760
    %639 = vmatpush1.xpose.msra.mxu0 %v638
    %640 = vmatprep.subr.mxu0 0.0
    %v641 = vand.u32 %v85, 4294901760
    %v642 = vsub.f32 %v85, %v641
    %v643 = vand.u32 %v642, 4294901760
    %644 = vmatpush1.xpose.msra.mxu0 %v643
    %645 = vmatprep.subr.mxu0 0.0
    %v646 = vand.u32 %v82, 4294901760
    %v647 = vsub.f32 %v82, %v646
    %v648 = vand.u32 %v647, 4294901760
    %649 = vmatpush1.xpose.msra.mxu0 %v648
    %650 = vmatprep.subr.mxu0 0.0
    %v651 = vand.u32 %v79, 4294901760
    %v652 = vsub.f32 %v79, %v651
    %v653 = vand.u32 %v652, 4294901760
    %654 = vmatpush1.xpose.msra.mxu0 %v653
    %655 = vmatprep.subr.mxu0 0.0
    %v656 = vand.u32 %v76, 4294901760
    %v657 = vsub.f32 %v76, %v656
    %v658 = vand.u32 %v657, 4294901760
    %659 = vmatpush1.xpose.msra.mxu0 %v658
    %660 = vmatprep.subr.mxu0 0.0
    %v661 = vand.u32 %v73, 4294901760
    %v662 = vsub.f32 %v73, %v661
    %v663 = vand.u32 %v662, 4294901760
    %664 = vmatpush1.xpose.msra.mxu0 %v663
    %665 = vmatprep.subr.mxu0 0.0
    %v666 = vand.u32 %v70, 4294901760
    %v667 = vsub.f32 %v70, %v666
    %v668 = vand.u32 %v667, 4294901760
    %669 = vmatpush1.xpose.msra.mxu0 %v668
    %670 = vmatprep.subr.mxu0 0.0
    %v671 = vand.u32 %v67, 4294901760
    %v672 = vsub.f32 %v67, %v671
    %v673 = vand.u32 %v672, 4294901760
    %674 = vmatpush1.xpose.msra.mxu0 %v673
    %675 = vmatprep.subr.mxu0 0.0
    %v676 = vand.u32 %v64, 4294901760
    %v677 = vsub.f32 %v64, %v676
    %v678 = vand.u32 %v677, 4294901760
    %679 = vmatpush1.xpose.msra.mxu0 %v678
    %680 = vmatprep.subr.mxu0 0.0
    %v681 = vand.u32 %v61, 4294901760
    %v682 = vsub.f32 %v61, %v681
    %v683 = vand.u32 %v682, 4294901760
    %684 = vmatpush1.xpose.msra.mxu0 %v683
    %685 = vmatprep.subr.mxu0 0.0
    %686 = vmatpush2.xpose.msra.mxu0 0.0
    %687 = vmatprep.subr.mxu0 0.0
    %688 = vmatpush2.xpose.msra.mxu0 0.0
    %689 = vmatprep.subr.mxu0 0.0
    %690 = vmatpush2.xpose.msra.mxu0 0.0
    %691 = vmatprep.subr.mxu0 0.0
    %692 = vmatpush2.xpose.msra.mxu0 0.0
    %693 = vmatprep.subr.mxu0 0.0
    %694 = vmatpush2.xpose.msra.mxu0 0.0
    %695 = vmatprep.subr.mxu0 0.0
    %696 = vmatpush2.xpose.msra.mxu0 0.0
    %697 = vmatprep.subr.mxu0 0.0
    %698 = vmatpush2.xpose.msra.mxu0 0.0
    %699 = vmatprep.subr.mxu0 0.0
    %700 = vmatpush2.xpose.msra.mxu0 0.0
    %701 = vmatprep.subr.mxu0 0.0
    %702 = vmatpush2.xpose.msra.mxu0 0.0
    %703 = vmatprep.subr.mxu0 0.0
    %704 = vmatpush2.xpose.msra.mxu0 0.0
    %705 = vmatprep.subr.mxu0 0.0
    %706 = vmatpush2.xpose.msra.mxu0 0.0
    %707 = vmatprep.subr.mxu0 0.0
    %708 = vmatpush2.xpose.msra.mxu0 0.0
    %709 = vmatprep.subr.mxu0 0.0
    %710 = vmatpush2.xpose.msra.mxu0 0.0
    %711 = vmatprep.subr.mxu0 0.0
    %712 = vmatpush2.xpose.msra.mxu0 0.0
    %713 = vmatprep.subr.mxu0 0.0
    %714 = vmatpush2.xpose.msra.mxu0 0.0
    %715 = vmatprep.subr.mxu0 0.0
    %716 = vmatpush2.xpose.msra.mxu0 0.0
    %717 = vmatprep.mubr.f32.mxu0 0.0
    %v718 = vand.u32 %v52, 4294901760
    %719 = vmatmul.mubr.f32.gmra.mxu0 %v718
    %v720 = vpop.f32.mrf.mxu0
    %v721 = vadd.f32 %v586, %v720
    %v722 = vpop.f32.mrf.mxu0
    %723 = vmatprep.mubr.f32.mxu0 0.0
    %v724 = vand.u32 %v55, 4294901760
    %725 = vmatmul.mubr.f32.gmra.mxu0 %v724
    %v726 = vpop.f32.mrf.mxu0
    %v727 = vadd.f32 %v594, %v726
    %v728 = vpop.f32.mrf.mxu0
    %729 = vmatprep.mubr.f32.mxu0 0.0
    %v730 = vand.u32 %v58, 4294901760
    %731 = vmatmul.mubr.f32.gmra.mxu0 %v730
    %v732 = vpop.f32.mrf.mxu0
    %v733 = vadd.f32 %v602, %v732
    %v734 = vpop.f32.mrf.mxu0
    %735 = vdwg.mxu0
    %736 = vmatprep.subr.mxu0 0.0
    %v737 = vand.u32 %v106, 4294901760
    %738 = vmatpush1.xpose.msra.mxu0 %v737
    %739 = vmatprep.subr.mxu0 0.0
    %v740 = vand.u32 %v103, 4294901760
    %741 = vmatpush1.xpose.msra.mxu0 %v740
    %742 = vmatprep.subr.mxu0 0.0
    %v743 = vand.u32 %v100, 4294901760
    %744 = vmatpush1.xpose.msra.mxu0 %v743
    %745 = vmatprep.subr.mxu0 0.0
    %v746 = vand.u32 %v97, 4294901760
    %747 = vmatpush1.xpose.msra.mxu0 %v746
    %748 = vmatprep.subr.mxu0 0.0
    %v749 = vand.u32 %v94, 4294901760
    %750 = vmatpush1.xpose.msra.mxu0 %v749
    %751 = vmatprep.subr.mxu0 0.0
    %v752 = vand.u32 %v91, 4294901760
    %753 = vmatpush1.xpose.msra.mxu0 %v752
    %754 = vmatprep.subr.mxu0 0.0
    %v755 = vand.u32 %v88, 4294901760
    %756 = vmatpush1.xpose.msra.mxu0 %v755
    %757 = vmatprep.subr.mxu0 0.0
    %v758 = vand.u32 %v85, 4294901760
    %759 = vmatpush1.xpose.msra.mxu0 %v758
    %760 = vmatprep.subr.mxu0 0.0
    %v761 = vand.u32 %v82, 4294901760
    %762 = vmatpush1.xpose.msra.mxu0 %v761
    %763 = vmatprep.subr.mxu0 0.0
    %v764 = vand.u32 %v79, 4294901760
    %765 = vmatpush1.xpose.msra.mxu0 %v764
    %766 = vmatprep.subr.mxu0 0.0
    %v767 = vand.u32 %v76, 4294901760
    %768 = vmatpush1.xpose.msra.mxu0 %v767
    %769 = vmatprep.subr.mxu0 0.0
    %v770 = vand.u32 %v73, 4294901760
    %771 = vmatpush1.xpose.msra.mxu0 %v770
    %772 = vmatprep.subr.mxu0 0.0
    %v773 = vand.u32 %v70, 4294901760
    %774 = vmatpush1.xpose.msra.mxu0 %v773
    %775 = vmatprep.subr.mxu0 0.0
    %v776 = vand.u32 %v67, 4294901760
    %777 = vmatpush1.xpose.msra.mxu0 %v776
    %778 = vmatprep.subr.mxu0 0.0
    %v779 = vand.u32 %v64, 4294901760
    %780 = vmatpush1.xpose.msra.mxu0 %v779
    %781 = vmatprep.subr.mxu0 0.0
    %v782 = vand.u32 %v61, 4294901760
    %783 = vmatpush1.xpose.msra.mxu0 %v782
    %784 = vmatprep.subr.mxu0 0.0
    %785 = vmatpush2.xpose.msra.mxu0 0.0
    %786 = vmatprep.subr.mxu0 0.0
    %787 = vmatpush2.xpose.msra.mxu0 0.0
    %788 = vmatprep.subr.mxu0 0.0
    %789 = vmatpush2.xpose.msra.mxu0 0.0
    %790 = vmatprep.subr.mxu0 0.0
    %791 = vmatpush2.xpose.msra.mxu0 0.0
    %792 = vmatprep.subr.mxu0 0.0
    %793 = vmatpush2.xpose.msra.mxu0 0.0
    %794 = vmatprep.subr.mxu0 0.0
    %795 = vmatpush2.xpose.msra.mxu0 0.0
    %796 = vmatprep.subr.mxu0 0.0
    %797 = vmatpush2.xpose.msra.mxu0 0.0
    %798 = vmatprep.subr.mxu0 0.0
    %799 = vmatpush2.xpose.msra.mxu0 0.0
    %800 = vmatprep.subr.mxu0 0.0
    %801 = vmatpush2.xpose.msra.mxu0 0.0
    %802 = vmatprep.subr.mxu0 0.0
    %803 = vmatpush2.xpose.msra.mxu0 0.0
    %804 = vmatprep.subr.mxu0 0.0
    %805 = vmatpush2.xpose.msra.mxu0 0.0
    %806 = vmatprep.subr.mxu0 0.0
    %807 = vmatpush2.xpose.msra.mxu0 0.0
    %808 = vmatprep.subr.mxu0 0.0
    %809 = vmatpush2.xpose.msra.mxu0 0.0
    %810 = vmatprep.subr.mxu0 0.0
    %811 = vmatpush2.xpose.msra.mxu0 0.0
    %812 = vmatprep.subr.mxu0 0.0
    %813 = vmatpush2.xpose.msra.mxu0 0.0
    %814 = vmatprep.subr.mxu0 0.0
    %815 = vmatpush2.xpose.msra.mxu0 0.0
    %816 = vmatprep.mubr.f32.mxu0 0.0
    %v817 = vand.u32 %v52, 4294901760
    %818 = vmatmul.mubr.f32.gmra.mxu0 %v817
    %v819 = vpop.f32.mrf.mxu0
    %v820 = vadd.f32 %v721, %v819
    %v821 = vpop.f32.mrf.mxu0
    %822 = vmatprep.mubr.f32.mxu0 0.0
    %v823 = vand.u32 %v55, 4294901760
    %824 = vmatmul.mubr.f32.gmra.mxu0 %v823
    %v825 = vpop.f32.mrf.mxu0
    %v826 = vadd.f32 %v727, %v825
    %v827 = vpop.f32.mrf.mxu0
    %828 = vmatprep.mubr.f32.mxu0 0.0
    %v829 = vand.u32 %v58, 4294901760
    %830 = vmatmul.mubr.f32.gmra.mxu0 %v829
    %v831 = vpop.f32.mrf.mxu0
    %v832 = vadd.f32 %v733, %v831
    %v833 = vpop.f32.mrf.mxu0
    %834 = vdwg.mxu0
    %v835 = vmul.f32 %v33, %v826
    %v836 = vrot.slane %v835, 4
    %v837 = vadd.f32 %v835, %v836
    %v838 = vrot.slane %v837, 2
    %v839 = vadd.f32 %v837, %v838
    %v840 = vrot.slane %v839, 1
    %v841 = vadd.f32 %v839, %v840
    %v842 = vadd.f32 %v841, %v820
    %v843 = vtanh.pop %v842
    %v844 = vlaneseq
    %v845 = vshrl.u32 %v844, 7
    %v846 = vsub.s32 0, %v845
    %v847 = vrot.slane %v843, %v846
    %v848 = vmul.f32 %v832, %v847
    %v849 = vadd.f32 %v33, %v848
    %v850 = vmul.f32 %v826, %v832
    %v851 = vrot.slane %v850, 4
    %v852 = vadd.f32 %v850, %v851
    %v853 = vrot.slane %v852, 2
    %v854 = vadd.f32 %v852, %v853
    %v855 = vrot.slane %v854, 1
    %v856 = vadd.f32 %v854, %v855
    %v857 = vmul.f32 %v843, %v843
    %v858 = vsub.f32 1.0, %v857
    %v859 = vmul.f32 %v858, %v856
    %v860 = vadd.f32 %v859, 1.0
    %v861 = vand.u32 2147483647, %v860
    %v862 = vlog2.pop %v861
    %v863 = vmul.f32 %v862, 0.6931472
    %v864 = vadd.f32 %v863, 0.0
    %s865 = scalar_lea.vmem %s1, 128
    %v866 = vld [vmem:[%s865] sm:$0xff]
    %v867 = vld [vmem:[%s865 + $0x8] sm:$0xff]
    %v868 = vld [vmem:[%s865 + $0x10] sm:$0xff]
    %v869 = vld [vmem:[%s865 + $0x18] sm:$0xff]
    %v870 = vld [vmem:[%s865 + $0x20] sm:$0xff]
    %v871 = vld [vmem:[%s865 + $0x28] sm:$0xff]
    %v872 = vld [vmem:[%s865 + $0x30] sm:$0xff]
    %v873 = vld [vmem:[%s865 + $0x38] sm:$0xff]
    %v874 = vld [vmem:[%s865 + $0x40] sm:$0xff]
    %v875 = vld [vmem:[%s865 + $0x48] sm:$0xff]
    %v876 = vld [vmem:[%s865 + $0x50] sm:$0xff]
    %v877 = vld [vmem:[%s865 + $0x58] sm:$0xff]
    %v878 = vld [vmem:[%s865 + $0x60] sm:$0xff]
    %v879 = vld [vmem:[%s865 + $0x68] sm:$0xff]
    %v880 = vld [vmem:[%s865 + $0x70] sm:$0xff]
    %v881 = vld [vmem:[%s865 + $0x78] sm:$0xff]
    %v883 = vsel %vm50, %v866, 0
    %v886 = vsel %vm50, %v867, 0
    %v889 = vsel %vm50, %v868, 0
    %v892 = vsel %vm50, %v869, 0
    %v895 = vsel %vm50, %v870, 0
    %v898 = vsel %vm50, %v871, 0
    %v901 = vsel %vm50, %v872, 0
    %v904 = vsel %vm50, %v873, 0
    %v907 = vsel %vm50, %v874, 0
    %v910 = vsel %vm50, %v875, 0
    %v913 = vsel %vm50, %v876, 0
    %v916 = vsel %vm50, %v877, 0
    %v919 = vsel %vm50, %v878, 0
    %v922 = vsel %vm50, %v879, 0
    %v925 = vsel %vm50, %v880, 0
    %v928 = vsel %vm50, %v881, 0
    %930 = vmatprep.subr.mxu0 0.0
    %v931 = vand.u32 %v928, 4294901760
    %932 = vmatpush1.xpose.msra.mxu0 %v931
    %933 = vmatprep.subr.mxu0 0.0
    %v934 = vand.u32 %v925, 4294901760
    %935 = vmatpush1.xpose.msra.mxu0 %v934
    %936 = vmatprep.subr.mxu0 0.0
    %v937 = vand.u32 %v922, 4294901760
    %938 = vmatpush1.xpose.msra.mxu0 %v937
    %939 = vmatprep.subr.mxu0 0.0
    %v940 = vand.u32 %v919, 4294901760
    %941 = vmatpush1.xpose.msra.mxu0 %v940
    %942 = vmatprep.subr.mxu0 0.0
    %v943 = vand.u32 %v916, 4294901760
    %944 = vmatpush1.xpose.msra.mxu0 %v943
    %945 = vmatprep.subr.mxu0 0.0
    %v946 = vand.u32 %v913, 4294901760
    %947 = vmatpush1.xpose.msra.mxu0 %v946
    %948 = vmatprep.subr.mxu0 0.0
    %v949 = vand.u32 %v910, 4294901760
    %950 = vmatpush1.xpose.msra.mxu0 %v949
    %951 = vmatprep.subr.mxu0 0.0
    %v952 = vand.u32 %v907, 4294901760
    %953 = vmatpush1.xpose.msra.mxu0 %v952
    %954 = vmatprep.subr.mxu0 0.0
    %v955 = vand.u32 %v904, 4294901760
    %956 = vmatpush1.xpose.msra.mxu0 %v955
    %957 = vmatprep.subr.mxu0 0.0
    %v958 = vand.u32 %v901, 4294901760
    %959 = vmatpush1.xpose.msra.mxu0 %v958
    %960 = vmatprep.subr.mxu0 0.0
    %v961 = vand.u32 %v898, 4294901760
    %962 = vmatpush1.xpose.msra.mxu0 %v961
    %963 = vmatprep.subr.mxu0 0.0
    %v964 = vand.u32 %v895, 4294901760
    %965 = vmatpush1.xpose.msra.mxu0 %v964
    %966 = vmatprep.subr.mxu0 0.0
    %v967 = vand.u32 %v892, 4294901760
    %968 = vmatpush1.xpose.msra.mxu0 %v967
    %969 = vmatprep.subr.mxu0 0.0
    %v970 = vand.u32 %v889, 4294901760
    %971 = vmatpush1.xpose.msra.mxu0 %v970
    %972 = vmatprep.subr.mxu0 0.0
    %v973 = vand.u32 %v886, 4294901760
    %974 = vmatpush1.xpose.msra.mxu0 %v973
    %975 = vmatprep.subr.mxu0 0.0
    %v976 = vand.u32 %v883, 4294901760
    %977 = vmatpush1.xpose.msra.mxu0 %v976
    %978 = vmatprep.subr.mxu0 0.0
    %979 = vmatpush2.xpose.msra.mxu0 0.0
    %980 = vmatprep.subr.mxu0 0.0
    %981 = vmatpush2.xpose.msra.mxu0 0.0
    %982 = vmatprep.subr.mxu0 0.0
    %983 = vmatpush2.xpose.msra.mxu0 0.0
    %984 = vmatprep.subr.mxu0 0.0
    %985 = vmatpush2.xpose.msra.mxu0 0.0
    %986 = vmatprep.subr.mxu0 0.0
    %987 = vmatpush2.xpose.msra.mxu0 0.0
    %988 = vmatprep.subr.mxu0 0.0
    %989 = vmatpush2.xpose.msra.mxu0 0.0
    %990 = vmatprep.subr.mxu0 0.0
    %991 = vmatpush2.xpose.msra.mxu0 0.0
    %992 = vmatprep.subr.mxu0 0.0
    %993 = vmatpush2.xpose.msra.mxu0 0.0
    %994 = vmatprep.subr.mxu0 0.0
    %995 = vmatpush2.xpose.msra.mxu0 0.0
    %996 = vmatprep.subr.mxu0 0.0
    %997 = vmatpush2.xpose.msra.mxu0 0.0
    %998 = vmatprep.subr.mxu0 0.0
    %999 = vmatpush2.xpose.msra.mxu0 0.0
    %1000 = vmatprep.subr.mxu0 0.0
    %1001 = vmatpush2.xpose.msra.mxu0 0.0
    %1002 = vmatprep.subr.mxu0 0.0
    %1003 = vmatpush2.xpose.msra.mxu0 0.0
    %1004 = vmatprep.subr.mxu0 0.0
    %1005 = vmatpush2.xpose.msra.mxu0 0.0
    %1006 = vmatprep.subr.mxu0 0.0
    %1007 = vmatpush2.xpose.msra.mxu0 0.0
    %1008 = vmatprep.subr.mxu0 0.0
    %1009 = vmatpush2.xpose.msra.mxu0 0.0
    %1010 = vmatprep.mubr.f32.mxu0 0.0
    %v1011 = vand.u32 %v52, 4294901760
    %v1012 = vsub.f32 %v52, %v1011
    %v1013 = vand.u32 %v1012, 4294901760
    %v1014 = vsub.f32 %v1012, %v1013
    %v1015 = vand.u32 %v1014, 4294901760
    %1016 = vmatmul.mubr.f32.gmra.mxu0 %v1015
    %v1017 = vpop.f32.mrf.mxu0
    %v1018 = vadd.f32 0.0, %v1017
    %v1019 = vpop.f32.mrf.mxu0
    %1020 = vmatprep.mubr.f32.mxu0 0.0
    %v1021 = vand.u32 %v55, 4294901760
    %v1022 = vsub.f32 %v55, %v1021
    %v1023 = vand.u32 %v1022, 4294901760
    %v1024 = vsub.f32 %v1022, %v1023
    %v1025 = vand.u32 %v1024, 4294901760
    %1026 = vmatmul.mubr.f32.gmra.mxu0 %v1025
    %v1027 = vpop.f32.mrf.mxu0
    %v1028 = vadd.f32 0.0, %v1027
    %v1029 = vpop.f32.mrf.mxu0
    %1030 = vmatprep.mubr.f32.mxu0 0.0
    %v1031 = vand.u32 %v58, 4294901760
    %v1032 = vsub.f32 %v58, %v1031
    %v1033 = vand.u32 %v1032, 4294901760
    %v1034 = vsub.f32 %v1032, %v1033
    %v1035 = vand.u32 %v1034, 4294901760
    %1036 = vmatmul.mubr.f32.gmra.mxu0 %v1035
    %v1037 = vpop.f32.mrf.mxu0
    %v1038 = vadd.f32 0.0, %v1037
    %v1039 = vpop.f32.mrf.mxu0
    %1040 = vdwg.mxu0
    %1041 = vmatprep.subr.mxu0 0.0
    %v1042 = vand.u32 %v928, 4294901760
    %v1043 = vsub.f32 %v928, %v1042
    %v1044 = vand.u32 %v1043, 4294901760
    %v1045 = vsub.f32 %v1043, %v1044
    %v1046 = vand.u32 %v1045, 4294901760
    %1047 = vmatpush1.xpose.msra.mxu0 %v1046
    %1048 = vmatprep.subr.mxu0 0.0
    %v1049 = vand.u32 %v925, 4294901760
    %v1050 = vsub.f32 %v925, %v1049
    %v1051 = vand.u32 %v1050, 4294901760
    %v1052 = vsub.f32 %v1050, %v1051
    %v1053 = vand.u32 %v1052, 4294901760
    %1054 = vmatpush1.xpose.msra.mxu0 %v1053
    %1055 = vmatprep.subr.mxu0 0.0
    %v1056 = vand.u32 %v922, 4294901760
    %v1057 = vsub.f32 %v922, %v1056
    %v1058 = vand.u32 %v1057, 4294901760
    %v1059 = vsub.f32 %v1057, %v1058
    %v1060 = vand.u32 %v1059, 4294901760
    %1061 = vmatpush1.xpose.msra.mxu0 %v1060
    %1062 = vmatprep.subr.mxu0 0.0
    %v1063 = vand.u32 %v919, 4294901760
    %v1064 = vsub.f32 %v919, %v1063
    %v1065 = vand.u32 %v1064, 4294901760
    %v1066 = vsub.f32 %v1064, %v1065
    %v1067 = vand.u32 %v1066, 4294901760
    %1068 = vmatpush1.xpose.msra.mxu0 %v1067
    %1069 = vmatprep.subr.mxu0 0.0
    %v1070 = vand.u32 %v916, 4294901760
    %v1071 = vsub.f32 %v916, %v1070
    %v1072 = vand.u32 %v1071, 4294901760
    %v1073 = vsub.f32 %v1071, %v1072
    %v1074 = vand.u32 %v1073, 4294901760
    %1075 = vmatpush1.xpose.msra.mxu0 %v1074
    %1076 = vmatprep.subr.mxu0 0.0
    %v1077 = vand.u32 %v913, 4294901760
    %v1078 = vsub.f32 %v913, %v1077
    %v1079 = vand.u32 %v1078, 4294901760
    %v1080 = vsub.f32 %v1078, %v1079
    %v1081 = vand.u32 %v1080, 4294901760
    %1082 = vmatpush1.xpose.msra.mxu0 %v1081
    %1083 = vmatprep.subr.mxu0 0.0
    %v1084 = vand.u32 %v910, 4294901760
    %v1085 = vsub.f32 %v910, %v1084
    %v1086 = vand.u32 %v1085, 4294901760
    %v1087 = vsub.f32 %v1085, %v1086
    %v1088 = vand.u32 %v1087, 4294901760
    %1089 = vmatpush1.xpose.msra.mxu0 %v1088
    %1090 = vmatprep.subr.mxu0 0.0
    %v1091 = vand.u32 %v907, 4294901760
    %v1092 = vsub.f32 %v907, %v1091
    %v1093 = vand.u32 %v1092, 4294901760
    %v1094 = vsub.f32 %v1092, %v1093
    %v1095 = vand.u32 %v1094, 4294901760
    %1096 = vmatpush1.xpose.msra.mxu0 %v1095
    %1097 = vmatprep.subr.mxu0 0.0
    %v1098 = vand.u32 %v904, 4294901760
    %v1099 = vsub.f32 %v904, %v1098
    %v1100 = vand.u32 %v1099, 4294901760
    %v1101 = vsub.f32 %v1099, %v1100
    %v1102 = vand.u32 %v1101, 4294901760
    %1103 = vmatpush1.xpose.msra.mxu0 %v1102
    %1104 = vmatprep.subr.mxu0 0.0
    %v1105 = vand.u32 %v901, 4294901760
    %v1106 = vsub.f32 %v901, %v1105
    %v1107 = vand.u32 %v1106, 4294901760
    %v1108 = vsub.f32 %v1106, %v1107
    %v1109 = vand.u32 %v1108, 4294901760
    %1110 = vmatpush1.xpose.msra.mxu0 %v1109
    %1111 = vmatprep.subr.mxu0 0.0
    %v1112 = vand.u32 %v898, 4294901760
    %v1113 = vsub.f32 %v898, %v1112
    %v1114 = vand.u32 %v1113, 4294901760
    %v1115 = vsub.f32 %v1113, %v1114
    %v1116 = vand.u32 %v1115, 4294901760
    %1117 = vmatpush1.xpose.msra.mxu0 %v1116
    %1118 = vmatprep.subr.mxu0 0.0
    %v1119 = vand.u32 %v895, 4294901760
    %v1120 = vsub.f32 %v895, %v1119
    %v1121 = vand.u32 %v1120, 4294901760
    %v1122 = vsub.f32 %v1120, %v1121
    %v1123 = vand.u32 %v1122, 4294901760
    %1124 = vmatpush1.xpose.msra.mxu0 %v1123
    %1125 = vmatprep.subr.mxu0 0.0
    %v1126 = vand.u32 %v892, 4294901760
    %v1127 = vsub.f32 %v892, %v1126
    %v1128 = vand.u32 %v1127, 4294901760
    %v1129 = vsub.f32 %v1127, %v1128
    %v1130 = vand.u32 %v1129, 4294901760
    %1131 = vmatpush1.xpose.msra.mxu0 %v1130
    %1132 = vmatprep.subr.mxu0 0.0
    %v1133 = vand.u32 %v889, 4294901760
    %v1134 = vsub.f32 %v889, %v1133
    %v1135 = vand.u32 %v1134, 4294901760
    %v1136 = vsub.f32 %v1134, %v1135
    %v1137 = vand.u32 %v1136, 4294901760
    %1138 = vmatpush1.xpose.msra.mxu0 %v1137
    %1139 = vmatprep.subr.mxu0 0.0
    %v1140 = vand.u32 %v886, 4294901760
    %v1141 = vsub.f32 %v886, %v1140
    %v1142 = vand.u32 %v1141, 4294901760
    %v1143 = vsub.f32 %v1141, %v1142
    %v1144 = vand.u32 %v1143, 4294901760
    %1145 = vmatpush1.xpose.msra.mxu0 %v1144
    %1146 = vmatprep.subr.mxu0 0.0
    %v1147 = vand.u32 %v883, 4294901760
    %v1148 = vsub.f32 %v883, %v1147
    %v1149 = vand.u32 %v1148, 4294901760
    %v1150 = vsub.f32 %v1148, %v1149
    %v1151 = vand.u32 %v1150, 4294901760
    %1152 = vmatpush1.xpose.msra.mxu0 %v1151
    %1153 = vmatprep.subr.mxu0 0.0
    %1154 = vmatpush2.xpose.msra.mxu0 0.0
    %1155 = vmatprep.subr.mxu0 0.0
    %1156 = vmatpush2.xpose.msra.mxu0 0.0
    %1157 = vmatprep.subr.mxu0 0.0
    %1158 = vmatpush2.xpose.msra.mxu0 0.0
    %1159 = vmatprep.subr.mxu0 0.0
    %1160 = vmatpush2.xpose.msra.mxu0 0.0
    %1161 = vmatprep.subr.mxu0 0.0
    %1162 = vmatpush2.xpose.msra.mxu0 0.0
    %1163 = vmatprep.subr.mxu0 0.0
    %1164 = vmatpush2.xpose.msra.mxu0 0.0
    %1165 = vmatprep.subr.mxu0 0.0
    %1166 = vmatpush2.xpose.msra.mxu0 0.0
    %1167 = vmatprep.subr.mxu0 0.0
    %1168 = vmatpush2.xpose.msra.mxu0 0.0
    %1169 = vmatprep.subr.mxu0 0.0
    %1170 = vmatpush2.xpose.msra.mxu0 0.0
    %1171 = vmatprep.subr.mxu0 0.0
    %1172 = vmatpush2.xpose.msra.mxu0 0.0
    %1173 = vmatprep.subr.mxu0 0.0
    %1174 = vmatpush2.xpose.msra.mxu0 0.0
    %1175 = vmatprep.subr.mxu0 0.0
    %1176 = vmatpush2.xpose.msra.mxu0 0.0
    %1177 = vmatprep.subr.mxu0 0.0
    %1178 = vmatpush2.xpose.msra.mxu0 0.0
    %1179 = vmatprep.subr.mxu0 0.0
    %1180 = vmatpush2.xpose.msra.mxu0 0.0
    %1181 = vmatprep.subr.mxu0 0.0
    %1182 = vmatpush2.xpose.msra.mxu0 0.0
    %1183 = vmatprep.subr.mxu0 0.0
    %1184 = vmatpush2.xpose.msra.mxu0 0.0
    %1185 = vmatprep.mubr.f32.mxu0 0.0
    %v1186 = vand.u32 %v52, 4294901760
    %1187 = vmatmul.mubr.f32.gmra.mxu0 %v1186
    %v1188 = vpop.f32.mrf.mxu0
    %v1189 = vadd.f32 %v1018, %v1188
    %v1190 = vpop.f32.mrf.mxu0
    %1191 = vmatprep.mubr.f32.mxu0 0.0
    %v1192 = vand.u32 %v55, 4294901760
    %1193 = vmatmul.mubr.f32.gmra.mxu0 %v1192
    %v1194 = vpop.f32.mrf.mxu0
    %v1195 = vadd.f32 %v1028, %v1194
    %v1196 = vpop.f32.mrf.mxu0
    %1197 = vmatprep.mubr.f32.mxu0 0.0
    %v1198 = vand.u32 %v58, 4294901760
    %1199 = vmatmul.mubr.f32.gmra.mxu0 %v1198
    %v1200 = vpop.f32.mrf.mxu0
    %v1201 = vadd.f32 %v1038, %v1200
    %v1202 = vpop.f32.mrf.mxu0
    %1203 = vdwg.mxu0
    %1204 = vmatprep.subr.mxu0 0.0
    %v1205 = vand.u32 %v928, 4294901760
    %v1206 = vsub.f32 %v928, %v1205
    %1207 = vmatpush1.xpose.msra.mxu0 %v1206
    %1208 = vmatprep.subr.mxu0 0.0
    %v1209 = vand.u32 %v925, 4294901760
    %v1210 = vsub.f32 %v925, %v1209
    %1211 = vmatpush1.xpose.msra.mxu0 %v1210
    %1212 = vmatprep.subr.mxu0 0.0
    %v1213 = vand.u32 %v922, 4294901760
    %v1214 = vsub.f32 %v922, %v1213
    %1215 = vmatpush1.xpose.msra.mxu0 %v1214
    %1216 = vmatprep.subr.mxu0 0.0
    %v1217 = vand.u32 %v919, 4294901760
    %v1218 = vsub.f32 %v919, %v1217
    %1219 = vmatpush1.xpose.msra.mxu0 %v1218
    %1220 = vmatprep.subr.mxu0 0.0
    %v1221 = vand.u32 %v916, 4294901760
    %v1222 = vsub.f32 %v916, %v1221
    %1223 = vmatpush1.xpose.msra.mxu0 %v1222
    %1224 = vmatprep.subr.mxu0 0.0
    %v1225 = vand.u32 %v913, 4294901760
    %v1226 = vsub.f32 %v913, %v1225
    %1227 = vmatpush1.xpose.msra.mxu0 %v1226
    %1228 = vmatprep.subr.mxu0 0.0
    %v1229 = vand.u32 %v910, 4294901760
    %v1230 = vsub.f32 %v910, %v1229
    %1231 = vmatpush1.xpose.msra.mxu0 %v1230
    %1232 = vmatprep.subr.mxu0 0.0
    %v1233 = vand.u32 %v907, 4294901760
    %v1234 = vsub.f32 %v907, %v1233
    %1235 = vmatpush1.xpose.msra.mxu0 %v1234
    %1236 = vmatprep.subr.mxu0 0.0
    %v1237 = vand.u32 %v904, 4294901760
    %v1238 = vsub.f32 %v904, %v1237
    %1239 = vmatpush1.xpose.msra.mxu0 %v1238
    %1240 = vmatprep.subr.mxu0 0.0
    %v1241 = vand.u32 %v901, 4294901760
    %v1242 = vsub.f32 %v901, %v1241
    %1243 = vmatpush1.xpose.msra.mxu0 %v1242
    %1244 = vmatprep.subr.mxu0 0.0
    %v1245 = vand.u32 %v898, 4294901760
    %v1246 = vsub.f32 %v898, %v1245
    %1247 = vmatpush1.xpose.msra.mxu0 %v1246
    %1248 = vmatprep.subr.mxu0 0.0
    %v1249 = vand.u32 %v895, 4294901760
    %v1250 = vsub.f32 %v895, %v1249
    %1251 = vmatpush1.xpose.msra.mxu0 %v1250
    %1252 = vmatprep.subr.mxu0 0.0
    %v1253 = vand.u32 %v892, 4294901760
    %v1254 = vsub.f32 %v892, %v1253
    %1255 = vmatpush1.xpose.msra.mxu0 %v1254
    %1256 = vmatprep.subr.mxu0 0.0
    %v1257 = vand.u32 %v889, 4294901760
    %v1258 = vsub.f32 %v889, %v1257
    %1259 = vmatpush1.xpose.msra.mxu0 %v1258
    %1260 = vmatprep.subr.mxu0 0.0
    %v1261 = vand.u32 %v886, 4294901760
    %v1262 = vsub.f32 %v886, %v1261
    %1263 = vmatpush1.xpose.msra.mxu0 %v1262
    %1264 = vmatprep.subr.mxu0 0.0
    %v1265 = vand.u32 %v883, 4294901760
    %v1266 = vsub.f32 %v883, %v1265
    %1267 = vmatpush1.xpose.msra.mxu0 %v1266
    %1268 = vmatprep.subr.mxu0 0.0
    %1269 = vmatpush2.xpose.msra.mxu0 0.0
    %1270 = vmatprep.subr.mxu0 0.0
    %1271 = vmatpush2.xpose.msra.mxu0 0.0
    %1272 = vmatprep.subr.mxu0 0.0
    %1273 = vmatpush2.xpose.msra.mxu0 0.0
    %1274 = vmatprep.subr.mxu0 0.0
    %1275 = vmatpush2.xpose.msra.mxu0 0.0
    %1276 = vmatprep.subr.mxu0 0.0
    %1277 = vmatpush2.xpose.msra.mxu0 0.0
    %1278 = vmatprep.subr.mxu0 0.0
    %1279 = vmatpush2.xpose.msra.mxu0 0.0
    %1280 = vmatprep.subr.mxu0 0.0
    %1281 = vmatpush2.xpose.msra.mxu0 0.0
    %1282 = vmatprep.subr.mxu0 0.0
    %1283 = vmatpush2.xpose.msra.mxu0 0.0
    %1284 = vmatprep.subr.mxu0 0.0
    %1285 = vmatpush2.xpose.msra.mxu0 0.0
    %1286 = vmatprep.subr.mxu0 0.0
    %1287 = vmatpush2.xpose.msra.mxu0 0.0
    %1288 = vmatprep.subr.mxu0 0.0
    %1289 = vmatpush2.xpose.msra.mxu0 0.0
    %1290 = vmatprep.subr.mxu0 0.0
    %1291 = vmatpush2.xpose.msra.mxu0 0.0
    %1292 = vmatprep.subr.mxu0 0.0
    %1293 = vmatpush2.xpose.msra.mxu0 0.0
    %1294 = vmatprep.subr.mxu0 0.0
    %1295 = vmatpush2.xpose.msra.mxu0 0.0
    %1296 = vmatprep.subr.mxu0 0.0
    %1297 = vmatpush2.xpose.msra.mxu0 0.0
    %1298 = vmatprep.subr.mxu0 0.0
    %1299 = vmatpush2.xpose.msra.mxu0 0.0
    %1300 = vmatprep.mubr.f32.mxu0 0.0
    %v1301 = vand.u32 %v52, 4294901760
    %v1302 = vsub.f32 %v52, %v1301
    %1303 = vmatmul.mubr.f32.gmra.mxu0 %v1302
    %v1304 = vpop.f32.mrf.mxu0
    %v1305 = vadd.f32 %v1189, %v1304
    %v1306 = vpop.f32.mrf.mxu0
    %1307 = vmatprep.mubr.f32.mxu0 0.0
    %v1308 = vand.u32 %v55, 4294901760
    %v1309 = vsub.f32 %v55, %v1308
    %1310 = vmatmul.mubr.f32.gmra.mxu0 %v1309
    %v1311 = vpop.f32.mrf.mxu0
    %v1312 = vadd.f32 %v1195, %v1311
    %v1313 = vpop.f32.mrf.mxu0
    %1314 = vmatprep.mubr.f32.mxu0 0.0
    %v1315 = vand.u32 %v58, 4294901760
    %v1316 = vsub.f32 %v58, %v1315
    %1317 = vmatmul.mubr.f32.gmra.mxu0 %v1316
    %v1318 = vpop.f32.mrf.mxu0
    %v1319 = vadd.f32 %v1201, %v1318
    %v1320 = vpop.f32.mrf.mxu0
    %1321 = vdwg.mxu0
    %1322 = vmatprep.subr.mxu0 0.0
    %v1323 = vand.u32 %v928, 4294901760
    %1324 = vmatpush1.xpose.msra.mxu0 %v1323
    %1325 = vmatprep.subr.mxu0 0.0
    %v1326 = vand.u32 %v925, 4294901760
    %1327 = vmatpush1.xpose.msra.mxu0 %v1326
    %1328 = vmatprep.subr.mxu0 0.0
    %v1329 = vand.u32 %v922, 4294901760
    %1330 = vmatpush1.xpose.msra.mxu0 %v1329
    %1331 = vmatprep.subr.mxu0 0.0
    %v1332 = vand.u32 %v919, 4294901760
    %1333 = vmatpush1.xpose.msra.mxu0 %v1332
    %1334 = vmatprep.subr.mxu0 0.0
    %v1335 = vand.u32 %v916, 4294901760
    %1336 = vmatpush1.xpose.msra.mxu0 %v1335
    %1337 = vmatprep.subr.mxu0 0.0
    %v1338 = vand.u32 %v913, 4294901760
    %1339 = vmatpush1.xpose.msra.mxu0 %v1338
    %1340 = vmatprep.subr.mxu0 0.0
    %v1341 = vand.u32 %v910, 4294901760
    %1342 = vmatpush1.xpose.msra.mxu0 %v1341
    %1343 = vmatprep.subr.mxu0 0.0
    %v1344 = vand.u32 %v907, 4294901760
    %1345 = vmatpush1.xpose.msra.mxu0 %v1344
    %1346 = vmatprep.subr.mxu0 0.0
    %v1347 = vand.u32 %v904, 4294901760
    %1348 = vmatpush1.xpose.msra.mxu0 %v1347
    %1349 = vmatprep.subr.mxu0 0.0
    %v1350 = vand.u32 %v901, 4294901760
    %1351 = vmatpush1.xpose.msra.mxu0 %v1350
    %1352 = vmatprep.subr.mxu0 0.0
    %v1353 = vand.u32 %v898, 4294901760
    %1354 = vmatpush1.xpose.msra.mxu0 %v1353
    %1355 = vmatprep.subr.mxu0 0.0
    %v1356 = vand.u32 %v895, 4294901760
    %1357 = vmatpush1.xpose.msra.mxu0 %v1356
    %1358 = vmatprep.subr.mxu0 0.0
    %v1359 = vand.u32 %v892, 4294901760
    %1360 = vmatpush1.xpose.msra.mxu0 %v1359
    %1361 = vmatprep.subr.mxu0 0.0
    %v1362 = vand.u32 %v889, 4294901760
    %1363 = vmatpush1.xpose.msra.mxu0 %v1362
    %1364 = vmatprep.subr.mxu0 0.0
    %v1365 = vand.u32 %v886, 4294901760
    %1366 = vmatpush1.xpose.msra.mxu0 %v1365
    %1367 = vmatprep.subr.mxu0 0.0
    %v1368 = vand.u32 %v883, 4294901760
    %1369 = vmatpush1.xpose.msra.mxu0 %v1368
    %1370 = vmatprep.subr.mxu0 0.0
    %1371 = vmatpush2.xpose.msra.mxu0 0.0
    %1372 = vmatprep.subr.mxu0 0.0
    %1373 = vmatpush2.xpose.msra.mxu0 0.0
    %1374 = vmatprep.subr.mxu0 0.0
    %1375 = vmatpush2.xpose.msra.mxu0 0.0
    %1376 = vmatprep.subr.mxu0 0.0
    %1377 = vmatpush2.xpose.msra.mxu0 0.0
    %1378 = vmatprep.subr.mxu0 0.0
    %1379 = vmatpush2.xpose.msra.mxu0 0.0
    %1380 = vmatprep.subr.mxu0 0.0
    %1381 = vmatpush2.xpose.msra.mxu0 0.0
    %1382 = vmatprep.subr.mxu0 0.0
    %1383 = vmatpush2.xpose.msra.mxu0 0.0
    %1384 = vmatprep.subr.mxu0 0.0
    %1385 = vmatpush2.xpose.msra.mxu0 0.0
    %1386 = vmatprep.subr.mxu0 0.0
    %1387 = vmatpush2.xpose.msra.mxu0 0.0
    %1388 = vmatprep.subr.mxu0 0.0
    %1389 = vmatpush2.xpose.msra.mxu0 0.0
    %1390 = vmatprep.subr.mxu0 0.0
    %1391 = vmatpush2.xpose.msra.mxu0 0.0
    %1392 = vmatprep.subr.mxu0 0.0
    %1393 = vmatpush2.xpose.msra.mxu0 0.0
    %1394 = vmatprep.subr.mxu0 0.0
    %1395 = vmatpush2.xpose.msra.mxu0 0.0
    %1396 = vmatprep.subr.mxu0 0.0
    %1397 = vmatpush2.xpose.msra.mxu0 0.0
    %1398 = vmatprep.subr.mxu0 0.0
    %1399 = vmatpush2.xpose.msra.mxu0 0.0
    %1400 = vmatprep.subr.mxu0 0.0
    %1401 = vmatpush2.xpose.msra.mxu0 0.0
    %1402 = vmatprep.mubr.f32.mxu0 0.0
    %v1403 = vand.u32 %v52, 4294901760
    %v1404 = vsub.f32 %v52, %v1403
    %v1405 = vand.u32 %v1404, 4294901760
    %1406 = vmatmul.mubr.f32.gmra.mxu0 %v1405
    %v1407 = vpop.f32.mrf.mxu0
    %v1408 = vadd.f32 %v1305, %v1407
    %v1409 = vpop.f32.mrf.mxu0
    %1410 = vmatprep.mubr.f32.mxu0 0.0
    %v1411 = vand.u32 %v55, 4294901760
    %v1412 = vsub.f32 %v55, %v1411
    %v1413 = vand.u32 %v1412, 4294901760
    %1414 = vmatmul.mubr.f32.gmra.mxu0 %v1413
    %v1415 = vpop.f32.mrf.mxu0
    %v1416 = vadd.f32 %v1312, %v1415
    %v1417 = vpop.f32.mrf.mxu0
    %1418 = vmatprep.mubr.f32.mxu0 0.0
    %v1419 = vand.u32 %v58, 4294901760
    %v1420 = vsub.f32 %v58, %v1419
    %v1421 = vand.u32 %v1420, 4294901760
    %1422 = vmatmul.mubr.f32.gmra.mxu0 %v1421
    %v1423 = vpop.f32.mrf.mxu0
    %v1424 = vadd.f32 %v1319, %v1423
    %v1425 = vpop.f32.mrf.mxu0
    %1426 = vdwg.mxu0
    %1427 = vmatprep.subr.mxu0 0.0
    %v1428 = vand.u32 %v928, 4294901760
    %v1429 = vsub.f32 %v928, %v1428
    %v1430 = vand.u32 %v1429, 4294901760
    %1431 = vmatpush1.xpose.msra.mxu0 %v1430
    %1432 = vmatprep.subr.mxu0 0.0
    %v1433 = vand.u32 %v925, 4294901760
    %v1434 = vsub.f32 %v925, %v1433
    %v1435 = vand.u32 %v1434, 4294901760
    %1436 = vmatpush1.xpose.msra.mxu0 %v1435
    %1437 = vmatprep.subr.mxu0 0.0
    %v1438 = vand.u32 %v922, 4294901760
    %v1439 = vsub.f32 %v922, %v1438
    %v1440 = vand.u32 %v1439, 4294901760
    %1441 = vmatpush1.xpose.msra.mxu0 %v1440
    %1442 = vmatprep.subr.mxu0 0.0
    %v1443 = vand.u32 %v919, 4294901760
    %v1444 = vsub.f32 %v919, %v1443
    %v1445 = vand.u32 %v1444, 4294901760
    %1446 = vmatpush1.xpose.msra.mxu0 %v1445
    %1447 = vmatprep.subr.mxu0 0.0
    %v1448 = vand.u32 %v916, 4294901760
    %v1449 = vsub.f32 %v916, %v1448
    %v1450 = vand.u32 %v1449, 4294901760
    %1451 = vmatpush1.xpose.msra.mxu0 %v1450
    %1452 = vmatprep.subr.mxu0 0.0
    %v1453 = vand.u32 %v913, 4294901760
    %v1454 = vsub.f32 %v913, %v1453
    %v1455 = vand.u32 %v1454, 4294901760
    %1456 = vmatpush1.xpose.msra.mxu0 %v1455
    %1457 = vmatprep.subr.mxu0 0.0
    %v1458 = vand.u32 %v910, 4294901760
    %v1459 = vsub.f32 %v910, %v1458
    %v1460 = vand.u32 %v1459, 4294901760
    %1461 = vmatpush1.xpose.msra.mxu0 %v1460
    %1462 = vmatprep.subr.mxu0 0.0
    %v1463 = vand.u32 %v907, 4294901760
    %v1464 = vsub.f32 %v907, %v1463
    %v1465 = vand.u32 %v1464, 4294901760
    %1466 = vmatpush1.xpose.msra.mxu0 %v1465
    %1467 = vmatprep.subr.mxu0 0.0
    %v1468 = vand.u32 %v904, 4294901760
    %v1469 = vsub.f32 %v904, %v1468
    %v1470 = vand.u32 %v1469, 4294901760
    %1471 = vmatpush1.xpose.msra.mxu0 %v1470
    %1472 = vmatprep.subr.mxu0 0.0
    %v1473 = vand.u32 %v901, 4294901760
    %v1474 = vsub.f32 %v901, %v1473
    %v1475 = vand.u32 %v1474, 4294901760
    %1476 = vmatpush1.xpose.msra.mxu0 %v1475
    %1477 = vmatprep.subr.mxu0 0.0
    %v1478 = vand.u32 %v898, 4294901760
    %v1479 = vsub.f32 %v898, %v1478
    %v1480 = vand.u32 %v1479, 4294901760
    %1481 = vmatpush1.xpose.msra.mxu0 %v1480
    %1482 = vmatprep.subr.mxu0 0.0
    %v1483 = vand.u32 %v895, 4294901760
    %v1484 = vsub.f32 %v895, %v1483
    %v1485 = vand.u32 %v1484, 4294901760
    %1486 = vmatpush1.xpose.msra.mxu0 %v1485
    %1487 = vmatprep.subr.mxu0 0.0
    %v1488 = vand.u32 %v892, 4294901760
    %v1489 = vsub.f32 %v892, %v1488
    %v1490 = vand.u32 %v1489, 4294901760
    %1491 = vmatpush1.xpose.msra.mxu0 %v1490
    %1492 = vmatprep.subr.mxu0 0.0
    %v1493 = vand.u32 %v889, 4294901760
    %v1494 = vsub.f32 %v889, %v1493
    %v1495 = vand.u32 %v1494, 4294901760
    %1496 = vmatpush1.xpose.msra.mxu0 %v1495
    %1497 = vmatprep.subr.mxu0 0.0
    %v1498 = vand.u32 %v886, 4294901760
    %v1499 = vsub.f32 %v886, %v1498
    %v1500 = vand.u32 %v1499, 4294901760
    %1501 = vmatpush1.xpose.msra.mxu0 %v1500
    %1502 = vmatprep.subr.mxu0 0.0
    %v1503 = vand.u32 %v883, 4294901760
    %v1504 = vsub.f32 %v883, %v1503
    %v1505 = vand.u32 %v1504, 4294901760
    %1506 = vmatpush1.xpose.msra.mxu0 %v1505
    %1507 = vmatprep.subr.mxu0 0.0
    %1508 = vmatpush2.xpose.msra.mxu0 0.0
    %1509 = vmatprep.subr.mxu0 0.0
    %1510 = vmatpush2.xpose.msra.mxu0 0.0
    %1511 = vmatprep.subr.mxu0 0.0
    %1512 = vmatpush2.xpose.msra.mxu0 0.0
    %1513 = vmatprep.subr.mxu0 0.0
    %1514 = vmatpush2.xpose.msra.mxu0 0.0
    %1515 = vmatprep.subr.mxu0 0.0
    %1516 = vmatpush2.xpose.msra.mxu0 0.0
    %1517 = vmatprep.subr.mxu0 0.0
    %1518 = vmatpush2.xpose.msra.mxu0 0.0
    %1519 = vmatprep.subr.mxu0 0.0
    %1520 = vmatpush2.xpose.msra.mxu0 0.0
    %1521 = vmatprep.subr.mxu0 0.0
    %1522 = vmatpush2.xpose.msra.mxu0 0.0
    %1523 = vmatprep.subr.mxu0 0.0
    %1524 = vmatpush2.xpose.msra.mxu0 0.0
    %1525 = vmatprep.subr.mxu0 0.0
    %1526 = vmatpush2.xpose.msra.mxu0 0.0
    %1527 = vmatprep.subr.mxu0 0.0
    %1528 = vmatpush2.xpose.msra.mxu0 0.0
    %1529 = vmatprep.subr.mxu0 0.0
    %1530 = vmatpush2.xpose.msra.mxu0 0.0
    %1531 = vmatprep.subr.mxu0 0.0
    %1532 = vmatpush2.xpose.msra.mxu0 0.0
    %1533 = vmatprep.subr.mxu0 0.0
    %1534 = vmatpush2.xpose.msra.mxu0 0.0
    %1535 = vmatprep.subr.mxu0 0.0
    %1536 = vmatpush2.xpose.msra.mxu0 0.0
    %1537 = vmatprep.subr.mxu0 0.0
    %1538 = vmatpush2.xpose.msra.mxu0 0.0
    %1539 = vmatprep.mubr.f32.mxu0 0.0
    %v1540 = vand.u32 %v52, 4294901760
    %1541 = vmatmul.mubr.f32.gmra.mxu0 %v1540
    %v1542 = vpop.f32.mrf.mxu0
    %v1543 = vadd.f32 %v1408, %v1542
    %v1544 = vpop.f32.mrf.mxu0
    %1545 = vmatprep.mubr.f32.mxu0 0.0
    %v1546 = vand.u32 %v55, 4294901760
    %1547 = vmatmul.mubr.f32.gmra.mxu0 %v1546
    %v1548 = vpop.f32.mrf.mxu0
    %v1549 = vadd.f32 %v1416, %v1548
    %v1550 = vpop.f32.mrf.mxu0
    %1551 = vmatprep.mubr.f32.mxu0 0.0
    %v1552 = vand.u32 %v58, 4294901760
    %1553 = vmatmul.mubr.f32.gmra.mxu0 %v1552
    %v1554 = vpop.f32.mrf.mxu0
    %v1555 = vadd.f32 %v1424, %v1554
    %v1556 = vpop.f32.mrf.mxu0
    %1557 = vdwg.mxu0
    %1558 = vmatprep.subr.mxu0 0.0
    %v1559 = vand.u32 %v928, 4294901760
    %1560 = vmatpush1.xpose.msra.mxu0 %v1559
    %1561 = vmatprep.subr.mxu0 0.0
    %v1562 = vand.u32 %v925, 4294901760
    %1563 = vmatpush1.xpose.msra.mxu0 %v1562
    %1564 = vmatprep.subr.mxu0 0.0
    %v1565 = vand.u32 %v922, 4294901760
    %1566 = vmatpush1.xpose.msra.mxu0 %v1565
    %1567 = vmatprep.subr.mxu0 0.0
    %v1568 = vand.u32 %v919, 4294901760
    %1569 = vmatpush1.xpose.msra.mxu0 %v1568
    %1570 = vmatprep.subr.mxu0 0.0
    %v1571 = vand.u32 %v916, 4294901760
    %1572 = vmatpush1.xpose.msra.mxu0 %v1571
    %1573 = vmatprep.subr.mxu0 0.0
    %v1574 = vand.u32 %v913, 4294901760
    %1575 = vmatpush1.xpose.msra.mxu0 %v1574
    %1576 = vmatprep.subr.mxu0 0.0
    %v1577 = vand.u32 %v910, 4294901760
    %1578 = vmatpush1.xpose.msra.mxu0 %v1577
    %1579 = vmatprep.subr.mxu0 0.0
    %v1580 = vand.u32 %v907, 4294901760
    %1581 = vmatpush1.xpose.msra.mxu0 %v1580
    %1582 = vmatprep.subr.mxu0 0.0
    %v1583 = vand.u32 %v904, 4294901760
    %1584 = vmatpush1.xpose.msra.mxu0 %v1583
    %1585 = vmatprep.subr.mxu0 0.0
    %v1586 = vand.u32 %v901, 4294901760
    %1587 = vmatpush1.xpose.msra.mxu0 %v1586
    %1588 = vmatprep.subr.mxu0 0.0
    %v1589 = vand.u32 %v898, 4294901760
    %1590 = vmatpush1.xpose.msra.mxu0 %v1589
    %1591 = vmatprep.subr.mxu0 0.0
    %v1592 = vand.u32 %v895, 4294901760
    %1593 = vmatpush1.xpose.msra.mxu0 %v1592
    %1594 = vmatprep.subr.mxu0 0.0
    %v1595 = vand.u32 %v892, 4294901760
    %1596 = vmatpush1.xpose.msra.mxu0 %v1595
    %1597 = vmatprep.subr.mxu0 0.0
    %v1598 = vand.u32 %v889, 4294901760
    %1599 = vmatpush1.xpose.msra.mxu0 %v1598
    %1600 = vmatprep.subr.mxu0 0.0
    %v1601 = vand.u32 %v886, 4294901760
    %1602 = vmatpush1.xpose.msra.mxu0 %v1601
    %1603 = vmatprep.subr.mxu0 0.0
    %v1604 = vand.u32 %v883, 4294901760
    %1605 = vmatpush1.xpose.msra.mxu0 %v1604
    %1606 = vmatprep.subr.mxu0 0.0
    %1607 = vmatpush2.xpose.msra.mxu0 0.0
    %1608 = vmatprep.subr.mxu0 0.0
    %1609 = vmatpush2.xpose.msra.mxu0 0.0
    %1610 = vmatprep.subr.mxu0 0.0
    %1611 = vmatpush2.xpose.msra.mxu0 0.0
    %1612 = vmatprep.subr.mxu0 0.0
    %1613 = vmatpush2.xpose.msra.mxu0 0.0
    %1614 = vmatprep.subr.mxu0 0.0
    %1615 = vmatpush2.xpose.msra.mxu0 0.0
    %1616 = vmatprep.subr.mxu0 0.0
    %1617 = vmatpush2.xpose.msra.mxu0 0.0
    %1618 = vmatprep.subr.mxu0 0.0
    %1619 = vmatpush2.xpose.msra.mxu0 0.0
    %1620 = vmatprep.subr.mxu0 0.0
    %1621 = vmatpush2.xpose.msra.mxu0 0.0
    %1622 = vmatprep.subr.mxu0 0.0
    %1623 = vmatpush2.xpose.msra.mxu0 0.0
    %1624 = vmatprep.subr.mxu0 0.0
    %1625 = vmatpush2.xpose.msra.mxu0 0.0
    %1626 = vmatprep.subr.mxu0 0.0
    %1627 = vmatpush2.xpose.msra.mxu0 0.0
    %1628 = vmatprep.subr.mxu0 0.0
    %1629 = vmatpush2.xpose.msra.mxu0 0.0
    %1630 = vmatprep.subr.mxu0 0.0
    %1631 = vmatpush2.xpose.msra.mxu0 0.0
    %1632 = vmatprep.subr.mxu0 0.0
    %1633 = vmatpush2.xpose.msra.mxu0 0.0
    %1634 = vmatprep.subr.mxu0 0.0
    %1635 = vmatpush2.xpose.msra.mxu0 0.0
    %1636 = vmatprep.subr.mxu0 0.0
    %1637 = vmatpush2.xpose.msra.mxu0 0.0
    %1638 = vmatprep.mubr.f32.mxu0 0.0
    %v1639 = vand.u32 %v52, 4294901760
    %1640 = vmatmul.mubr.f32.gmra.mxu0 %v1639
    %v1641 = vpop.f32.mrf.mxu0
    %v1642 = vadd.f32 %v1543, %v1641
    %v1643 = vpop.f32.mrf.mxu0
    %1644 = vmatprep.mubr.f32.mxu0 0.0
    %v1645 = vand.u32 %v55, 4294901760
    %1646 = vmatmul.mubr.f32.gmra.mxu0 %v1645
    %v1647 = vpop.f32.mrf.mxu0
    %v1648 = vadd.f32 %v1549, %v1647
    %v1649 = vpop.f32.mrf.mxu0
    %1650 = vmatprep.mubr.f32.mxu0 0.0
    %v1651 = vand.u32 %v58, 4294901760
    %1652 = vmatmul.mubr.f32.gmra.mxu0 %v1651
    %v1653 = vpop.f32.mrf.mxu0
    %v1654 = vadd.f32 %v1555, %v1653
    %v1655 = vpop.f32.mrf.mxu0
    %1656 = vdwg.mxu0
    %v1657 = vmul.f32 %v849, %v1648
    %v1658 = vrot.slane %v1657, 4
    %v1659 = vadd.f32 %v1657, %v1658
    %v1660 = vrot.slane %v1659, 2
    %v1661 = vadd.f32 %v1659, %v1660
    %v1662 = vrot.slane %v1661, 1
    %v1663 = vadd.f32 %v1661, %v1662
    %v1664 = vadd.f32 %v1663, %v1642
    %v1665 = vtanh.pop %v1664
    %v1666 = vlaneseq
    %v1667 = vshrl.u32 %v1666, 7
    %v1668 = vsub.s32 0, %v1667
    %v1669 = vrot.slane %v1665, %v1668
    %v1670 = vmul.f32 %v1654, %v1669
    %v1671 = vadd.f32 %v849, %v1670
    %v1672 = vmul.f32 %v1648, %v1654
    %v1673 = vrot.slane %v1672, 4
    %v1674 = vadd.f32 %v1672, %v1673
    %v1675 = vrot.slane %v1674, 2
    %v1676 = vadd.f32 %v1674, %v1675
    %v1677 = vrot.slane %v1676, 1
    %v1678 = vadd.f32 %v1676, %v1677
    %v1679 = vmul.f32 %v1665, %v1665
    %v1680 = vsub.f32 1.0, %v1679
    %v1681 = vmul.f32 %v1680, %v1678
    %v1682 = vadd.f32 %v1681, 1.0
    %v1683 = vand.u32 2147483647, %v1682
    %v1684 = vlog2.pop %v1683
    %v1685 = vmul.f32 %v1684, 0.6931472
    %v1686 = vadd.f32 %v864, %v1685
    %s1687 = scalar_lea.vmem %s1, 256
    %v1688 = vld [vmem:[%s1687] sm:$0xff]
    %v1689 = vld [vmem:[%s1687 + $0x8] sm:$0xff]
    %v1690 = vld [vmem:[%s1687 + $0x10] sm:$0xff]
    %v1691 = vld [vmem:[%s1687 + $0x18] sm:$0xff]
    %v1692 = vld [vmem:[%s1687 + $0x20] sm:$0xff]
    %v1693 = vld [vmem:[%s1687 + $0x28] sm:$0xff]
    %v1694 = vld [vmem:[%s1687 + $0x30] sm:$0xff]
    %v1695 = vld [vmem:[%s1687 + $0x38] sm:$0xff]
    %v1696 = vld [vmem:[%s1687 + $0x40] sm:$0xff]
    %v1697 = vld [vmem:[%s1687 + $0x48] sm:$0xff]
    %v1698 = vld [vmem:[%s1687 + $0x50] sm:$0xff]
    %v1699 = vld [vmem:[%s1687 + $0x58] sm:$0xff]
    %v1700 = vld [vmem:[%s1687 + $0x60] sm:$0xff]
    %v1701 = vld [vmem:[%s1687 + $0x68] sm:$0xff]
    %v1702 = vld [vmem:[%s1687 + $0x70] sm:$0xff]
    %v1703 = vld [vmem:[%s1687 + $0x78] sm:$0xff]
    %v1705 = vsel %vm50, %v1688, 0
    %v1708 = vsel %vm50, %v1689, 0
    %v1711 = vsel %vm50, %v1690, 0
    %v1714 = vsel %vm50, %v1691, 0
    %v1717 = vsel %vm50, %v1692, 0
    %v1720 = vsel %vm50, %v1693, 0
    %v1723 = vsel %vm50, %v1694, 0
    %v1726 = vsel %vm50, %v1695, 0
    %v1729 = vsel %vm50, %v1696, 0
    %v1732 = vsel %vm50, %v1697, 0
    %v1735 = vsel %vm50, %v1698, 0
    %v1738 = vsel %vm50, %v1699, 0
    %v1741 = vsel %vm50, %v1700, 0
    %v1744 = vsel %vm50, %v1701, 0
    %v1747 = vsel %vm50, %v1702, 0
    %v1750 = vsel %vm50, %v1703, 0
    %1752 = vmatprep.subr.mxu0 0.0
    %v1753 = vand.u32 %v1750, 4294901760
    %1754 = vmatpush1.xpose.msra.mxu0 %v1753
    %1755 = vmatprep.subr.mxu0 0.0
    %v1756 = vand.u32 %v1747, 4294901760
    %1757 = vmatpush1.xpose.msra.mxu0 %v1756
    %1758 = vmatprep.subr.mxu0 0.0
    %v1759 = vand.u32 %v1744, 4294901760
    %1760 = vmatpush1.xpose.msra.mxu0 %v1759
    %1761 = vmatprep.subr.mxu0 0.0
    %v1762 = vand.u32 %v1741, 4294901760
    %1763 = vmatpush1.xpose.msra.mxu0 %v1762
    %1764 = vmatprep.subr.mxu0 0.0
    %v1765 = vand.u32 %v1738, 4294901760
    %1766 = vmatpush1.xpose.msra.mxu0 %v1765
    %1767 = vmatprep.subr.mxu0 0.0
    %v1768 = vand.u32 %v1735, 4294901760
    %1769 = vmatpush1.xpose.msra.mxu0 %v1768
    %1770 = vmatprep.subr.mxu0 0.0
    %v1771 = vand.u32 %v1732, 4294901760
    %1772 = vmatpush1.xpose.msra.mxu0 %v1771
    %1773 = vmatprep.subr.mxu0 0.0
    %v1774 = vand.u32 %v1729, 4294901760
    %1775 = vmatpush1.xpose.msra.mxu0 %v1774
    %1776 = vmatprep.subr.mxu0 0.0
    %v1777 = vand.u32 %v1726, 4294901760
    %1778 = vmatpush1.xpose.msra.mxu0 %v1777
    %1779 = vmatprep.subr.mxu0 0.0
    %v1780 = vand.u32 %v1723, 4294901760
    %1781 = vmatpush1.xpose.msra.mxu0 %v1780
    %1782 = vmatprep.subr.mxu0 0.0
    %v1783 = vand.u32 %v1720, 4294901760
    %1784 = vmatpush1.xpose.msra.mxu0 %v1783
    %1785 = vmatprep.subr.mxu0 0.0
    %v1786 = vand.u32 %v1717, 4294901760
    %1787 = vmatpush1.xpose.msra.mxu0 %v1786
    %1788 = vmatprep.subr.mxu0 0.0
    %v1789 = vand.u32 %v1714, 4294901760
    %1790 = vmatpush1.xpose.msra.mxu0 %v1789
    %1791 = vmatprep.subr.mxu0 0.0
    %v1792 = vand.u32 %v1711, 4294901760
    %1793 = vmatpush1.xpose.msra.mxu0 %v1792
    %1794 = vmatprep.subr.mxu0 0.0
    %v1795 = vand.u32 %v1708, 4294901760
    %1796 = vmatpush1.xpose.msra.mxu0 %v1795
    %1797 = vmatprep.subr.mxu0 0.0
    %v1798 = vand.u32 %v1705, 4294901760
    %1799 = vmatpush1.xpose.msra.mxu0 %v1798
    %1800 = vmatprep.subr.mxu0 0.0
    %1801 = vmatpush2.xpose.msra.mxu0 0.0
    %1802 = vmatprep.subr.mxu0 0.0
    %1803 = vmatpush2.xpose.msra.mxu0 0.0
    %1804 = vmatprep.subr.mxu0 0.0
    %1805 = vmatpush2.xpose.msra.mxu0 0.0
    %1806 = vmatprep.subr.mxu0 0.0
    %1807 = vmatpush2.xpose.msra.mxu0 0.0
    %1808 = vmatprep.subr.mxu0 0.0
    %1809 = vmatpush2.xpose.msra.mxu0 0.0
    %1810 = vmatprep.subr.mxu0 0.0
    %1811 = vmatpush2.xpose.msra.mxu0 0.0
    %1812 = vmatprep.subr.mxu0 0.0
    %1813 = vmatpush2.xpose.msra.mxu0 0.0
    %1814 = vmatprep.subr.mxu0 0.0
    %1815 = vmatpush2.xpose.msra.mxu0 0.0
    %1816 = vmatprep.subr.mxu0 0.0
    %1817 = vmatpush2.xpose.msra.mxu0 0.0
    %1818 = vmatprep.subr.mxu0 0.0
    %1819 = vmatpush2.xpose.msra.mxu0 0.0
    %1820 = vmatprep.subr.mxu0 0.0
    %1821 = vmatpush2.xpose.msra.mxu0 0.0
    %1822 = vmatprep.subr.mxu0 0.0
    %1823 = vmatpush2.xpose.msra.mxu0 0.0
    %1824 = vmatprep.subr.mxu0 0.0
    %1825 = vmatpush2.xpose.msra.mxu0 0.0
    %1826 = vmatprep.subr.mxu0 0.0
    %1827 = vmatpush2.xpose.msra.mxu0 0.0
    %1828 = vmatprep.subr.mxu0 0.0
    %1829 = vmatpush2.xpose.msra.mxu0 0.0
    %1830 = vmatprep.subr.mxu0 0.0
    %1831 = vmatpush2.xpose.msra.mxu0 0.0
    %1832 = vmatprep.mubr.f32.mxu0 0.0
    %v1833 = vand.u32 %v52, 4294901760
    %v1834 = vsub.f32 %v52, %v1833
    %v1835 = vand.u32 %v1834, 4294901760
    %v1836 = vsub.f32 %v1834, %v1835
    %v1837 = vand.u32 %v1836, 4294901760
    %1838 = vmatmul.mubr.f32.gmra.mxu0 %v1837
    %v1839 = vpop.f32.mrf.mxu0
    %v1840 = vadd.f32 0.0, %v1839
    %v1841 = vpop.f32.mrf.mxu0
    %1842 = vmatprep.mubr.f32.mxu0 0.0
    %v1843 = vand.u32 %v55, 4294901760
    %v1844 = vsub.f32 %v55, %v1843
    %v1845 = vand.u32 %v1844, 4294901760
    %v1846 = vsub.f32 %v1844, %v1845
    %v1847 = vand.u32 %v1846, 4294901760
    %1848 = vmatmul.mubr.f32.gmra.mxu0 %v1847
    %v1849 = vpop.f32.mrf.mxu0
    %v1850 = vadd.f32 0.0, %v1849
    %v1851 = vpop.f32.mrf.mxu0
    %1852 = vmatprep.mubr.f32.mxu0 0.0
    %v1853 = vand.u32 %v58, 4294901760
    %v1854 = vsub.f32 %v58, %v1853
    %v1855 = vand.u32 %v1854, 4294901760
    %v1856 = vsub.f32 %v1854, %v1855
    %v1857 = vand.u32 %v1856, 4294901760
    %1858 = vmatmul.mubr.f32.gmra.mxu0 %v1857
    %v1859 = vpop.f32.mrf.mxu0
    %v1860 = vadd.f32 0.0, %v1859
    %v1861 = vpop.f32.mrf.mxu0
    %1862 = vdwg.mxu0
    %1863 = vmatprep.subr.mxu0 0.0
    %v1864 = vand.u32 %v1750, 4294901760
    %v1865 = vsub.f32 %v1750, %v1864
    %v1866 = vand.u32 %v1865, 4294901760
    %v1867 = vsub.f32 %v1865, %v1866
    %v1868 = vand.u32 %v1867, 4294901760
    %1869 = vmatpush1.xpose.msra.mxu0 %v1868
    %1870 = vmatprep.subr.mxu0 0.0
    %v1871 = vand.u32 %v1747, 4294901760
    %v1872 = vsub.f32 %v1747, %v1871
    %v1873 = vand.u32 %v1872, 4294901760
    %v1874 = vsub.f32 %v1872, %v1873
    %v1875 = vand.u32 %v1874, 4294901760
    %1876 = vmatpush1.xpose.msra.mxu0 %v1875
    %1877 = vmatprep.subr.mxu0 0.0
    %v1878 = vand.u32 %v1744, 4294901760
    %v1879 = vsub.f32 %v1744, %v1878
    %v1880 = vand.u32 %v1879, 4294901760
    %v1881 = vsub.f32 %v1879, %v1880
    %v1882 = vand.u32 %v1881, 4294901760
    %1883 = vmatpush1.xpose.msra.mxu0 %v1882
    %1884 = vmatprep.subr.mxu0 0.0
    %v1885 = vand.u32 %v1741, 4294901760
    %v1886 = vsub.f32 %v1741, %v1885
    %v1887 = vand.u32 %v1886, 4294901760
    %v1888 = vsub.f32 %v1886, %v1887
    %v1889 = vand.u32 %v1888, 4294901760
    %1890 = vmatpush1.xpose.msra.mxu0 %v1889
    %1891 = vmatprep.subr.mxu0 0.0
    %v1892 = vand.u32 %v1738, 4294901760
    %v1893 = vsub.f32 %v1738, %v1892
    %v1894 = vand.u32 %v1893, 4294901760
    %v1895 = vsub.f32 %v1893, %v1894
    %v1896 = vand.u32 %v1895, 4294901760
    %1897 = vmatpush1.xpose.msra.mxu0 %v1896
    %1898 = vmatprep.subr.mxu0 0.0
    %v1899 = vand.u32 %v1735, 4294901760
    %v1900 = vsub.f32 %v1735, %v1899
    %v1901 = vand.u32 %v1900, 4294901760
    %v1902 = vsub.f32 %v1900, %v1901
    %v1903 = vand.u32 %v1902, 4294901760
    %1904 = vmatpush1.xpose.msra.mxu0 %v1903
    %1905 = vmatprep.subr.mxu0 0.0
    %v1906 = vand.u32 %v1732, 4294901760
    %v1907 = vsub.f32 %v1732, %v1906
    %v1908 = vand.u32 %v1907, 4294901760
    %v1909 = vsub.f32 %v1907, %v1908
    %v1910 = vand.u32 %v1909, 4294901760
    %1911 = vmatpush1.xpose.msra.mxu0 %v1910
    %1912 = vmatprep.subr.mxu0 0.0
    %v1913 = vand.u32 %v1729, 4294901760
    %v1914 = vsub.f32 %v1729, %v1913
    %v1915 = vand.u32 %v1914, 4294901760
    %v1916 = vsub.f32 %v1914, %v1915
    %v1917 = vand.u32 %v1916, 4294901760
    %1918 = vmatpush1.xpose.msra.mxu0 %v1917
    %1919 = vmatprep.subr.mxu0 0.0
    %v1920 = vand.u32 %v1726, 4294901760
    %v1921 = vsub.f32 %v1726, %v1920
    %v1922 = vand.u32 %v1921, 4294901760
    %v1923 = vsub.f32 %v1921, %v1922
    %v1924 = vand.u32 %v1923, 4294901760
    %1925 = vmatpush1.xpose.msra.mxu0 %v1924
    %1926 = vmatprep.subr.mxu0 0.0
    %v1927 = vand.u32 %v1723, 4294901760
    %v1928 = vsub.f32 %v1723, %v1927
    %v1929 = vand.u32 %v1928, 4294901760
    %v1930 = vsub.f32 %v1928, %v1929
    %v1931 = vand.u32 %v1930, 4294901760
    %1932 = vmatpush1.xpose.msra.mxu0 %v1931
    %1933 = vmatprep.subr.mxu0 0.0
    %v1934 = vand.u32 %v1720, 4294901760
    %v1935 = vsub.f32 %v1720, %v1934
    %v1936 = vand.u32 %v1935, 4294901760
    %v1937 = vsub.f32 %v1935, %v1936
    %v1938 = vand.u32 %v1937, 4294901760
    %1939 = vmatpush1.xpose.msra.mxu0 %v1938
    %1940 = vmatprep.subr.mxu0 0.0
    %v1941 = vand.u32 %v1717, 4294901760
    %v1942 = vsub.f32 %v1717, %v1941
    %v1943 = vand.u32 %v1942, 4294901760
    %v1944 = vsub.f32 %v1942, %v1943
    %v1945 = vand.u32 %v1944, 4294901760
    %1946 = vmatpush1.xpose.msra.mxu0 %v1945
    %1947 = vmatprep.subr.mxu0 0.0
    %v1948 = vand.u32 %v1714, 4294901760
    %v1949 = vsub.f32 %v1714, %v1948
    %v1950 = vand.u32 %v1949, 4294901760
    %v1951 = vsub.f32 %v1949, %v1950
    %v1952 = vand.u32 %v1951, 4294901760
    %1953 = vmatpush1.xpose.msra.mxu0 %v1952
    %1954 = vmatprep.subr.mxu0 0.0
    %v1955 = vand.u32 %v1711, 4294901760
    %v1956 = vsub.f32 %v1711, %v1955
    %v1957 = vand.u32 %v1956, 4294901760
    %v1958 = vsub.f32 %v1956, %v1957
    %v1959 = vand.u32 %v1958, 4294901760
    %1960 = vmatpush1.xpose.msra.mxu0 %v1959
    %1961 = vmatprep.subr.mxu0 0.0
    %v1962 = vand.u32 %v1708, 4294901760
    %v1963 = vsub.f32 %v1708, %v1962
    %v1964 = vand.u32 %v1963, 4294901760
    %v1965 = vsub.f32 %v1963, %v1964
    %v1966 = vand.u32 %v1965, 4294901760
    %1967 = vmatpush1.xpose.msra.mxu0 %v1966
    %1968 = vmatprep.subr.mxu0 0.0
    %v1969 = vand.u32 %v1705, 4294901760
    %v1970 = vsub.f32 %v1705, %v1969
    %v1971 = vand.u32 %v1970, 4294901760
    %v1972 = vsub.f32 %v1970, %v1971
    %v1973 = vand.u32 %v1972, 4294901760
    %1974 = vmatpush1.xpose.msra.mxu0 %v1973
    %1975 = vmatprep.subr.mxu0 0.0
    %1976 = vmatpush2.xpose.msra.mxu0 0.0
    %1977 = vmatprep.subr.mxu0 0.0
    %1978 = vmatpush2.xpose.msra.mxu0 0.0
    %1979 = vmatprep.subr.mxu0 0.0
    %1980 = vmatpush2.xpose.msra.mxu0 0.0
    %1981 = vmatprep.subr.mxu0 0.0
    %1982 = vmatpush2.xpose.msra.mxu0 0.0
    %1983 = vmatprep.subr.mxu0 0.0
    %1984 = vmatpush2.xpose.msra.mxu0 0.0
    %1985 = vmatprep.subr.mxu0 0.0
    %1986 = vmatpush2.xpose.msra.mxu0 0.0
    %1987 = vmatprep.subr.mxu0 0.0
    %1988 = vmatpush2.xpose.msra.mxu0 0.0
    %1989 = vmatprep.subr.mxu0 0.0
    %1990 = vmatpush2.xpose.msra.mxu0 0.0
    %1991 = vmatprep.subr.mxu0 0.0
    %1992 = vmatpush2.xpose.msra.mxu0 0.0
    %1993 = vmatprep.subr.mxu0 0.0
    %1994 = vmatpush2.xpose.msra.mxu0 0.0
    %1995 = vmatprep.subr.mxu0 0.0
    %1996 = vmatpush2.xpose.msra.mxu0 0.0
    %1997 = vmatprep.subr.mxu0 0.0
    %1998 = vmatpush2.xpose.msra.mxu0 0.0
    %1999 = vmatprep.subr.mxu0 0.0
    %2000 = vmatpush2.xpose.msra.mxu0 0.0
    %2001 = vmatprep.subr.mxu0 0.0
    %2002 = vmatpush2.xpose.msra.mxu0 0.0
    %2003 = vmatprep.subr.mxu0 0.0
    %2004 = vmatpush2.xpose.msra.mxu0 0.0
    %2005 = vmatprep.subr.mxu0 0.0
    %2006 = vmatpush2.xpose.msra.mxu0 0.0
    %2007 = vmatprep.mubr.f32.mxu0 0.0
    %v2008 = vand.u32 %v52, 4294901760
    %2009 = vmatmul.mubr.f32.gmra.mxu0 %v2008
    %v2010 = vpop.f32.mrf.mxu0
    %v2011 = vadd.f32 %v1840, %v2010
    %v2012 = vpop.f32.mrf.mxu0
    %2013 = vmatprep.mubr.f32.mxu0 0.0
    %v2014 = vand.u32 %v55, 4294901760
    %2015 = vmatmul.mubr.f32.gmra.mxu0 %v2014
    %v2016 = vpop.f32.mrf.mxu0
    %v2017 = vadd.f32 %v1850, %v2016
    %v2018 = vpop.f32.mrf.mxu0
    %2019 = vmatprep.mubr.f32.mxu0 0.0
    %v2020 = vand.u32 %v58, 4294901760
    %2021 = vmatmul.mubr.f32.gmra.mxu0 %v2020
    %v2022 = vpop.f32.mrf.mxu0
    %v2023 = vadd.f32 %v1860, %v2022
    %v2024 = vpop.f32.mrf.mxu0
    %2025 = vdwg.mxu0
    %2026 = vmatprep.subr.mxu0 0.0
    %v2027 = vand.u32 %v1750, 4294901760
    %v2028 = vsub.f32 %v1750, %v2027
    %2029 = vmatpush1.xpose.msra.mxu0 %v2028
    %2030 = vmatprep.subr.mxu0 0.0
    %v2031 = vand.u32 %v1747, 4294901760
    %v2032 = vsub.f32 %v1747, %v2031
    %2033 = vmatpush1.xpose.msra.mxu0 %v2032
    %2034 = vmatprep.subr.mxu0 0.0
    %v2035 = vand.u32 %v1744, 4294901760
    %v2036 = vsub.f32 %v1744, %v2035
    %2037 = vmatpush1.xpose.msra.mxu0 %v2036
    %2038 = vmatprep.subr.mxu0 0.0
    %v2039 = vand.u32 %v1741, 4294901760
    %v2040 = vsub.f32 %v1741, %v2039
    %2041 = vmatpush1.xpose.msra.mxu0 %v2040
    %2042 = vmatprep.subr.mxu0 0.0
    %v2043 = vand.u32 %v1738, 4294901760
    %v2044 = vsub.f32 %v1738, %v2043
    %2045 = vmatpush1.xpose.msra.mxu0 %v2044
    %2046 = vmatprep.subr.mxu0 0.0
    %v2047 = vand.u32 %v1735, 4294901760
    %v2048 = vsub.f32 %v1735, %v2047
    %2049 = vmatpush1.xpose.msra.mxu0 %v2048
    %2050 = vmatprep.subr.mxu0 0.0
    %v2051 = vand.u32 %v1732, 4294901760
    %v2052 = vsub.f32 %v1732, %v2051
    %2053 = vmatpush1.xpose.msra.mxu0 %v2052
    %2054 = vmatprep.subr.mxu0 0.0
    %v2055 = vand.u32 %v1729, 4294901760
    %v2056 = vsub.f32 %v1729, %v2055
    %2057 = vmatpush1.xpose.msra.mxu0 %v2056
    %2058 = vmatprep.subr.mxu0 0.0
    %v2059 = vand.u32 %v1726, 4294901760
    %v2060 = vsub.f32 %v1726, %v2059
    %2061 = vmatpush1.xpose.msra.mxu0 %v2060
    %2062 = vmatprep.subr.mxu0 0.0
    %v2063 = vand.u32 %v1723, 4294901760
    %v2064 = vsub.f32 %v1723, %v2063
    %2065 = vmatpush1.xpose.msra.mxu0 %v2064
    %2066 = vmatprep.subr.mxu0 0.0
    %v2067 = vand.u32 %v1720, 4294901760
    %v2068 = vsub.f32 %v1720, %v2067
    %2069 = vmatpush1.xpose.msra.mxu0 %v2068
    %2070 = vmatprep.subr.mxu0 0.0
    %v2071 = vand.u32 %v1717, 4294901760
    %v2072 = vsub.f32 %v1717, %v2071
    %2073 = vmatpush1.xpose.msra.mxu0 %v2072
    %2074 = vmatprep.subr.mxu0 0.0
    %v2075 = vand.u32 %v1714, 4294901760
    %v2076 = vsub.f32 %v1714, %v2075
    %2077 = vmatpush1.xpose.msra.mxu0 %v2076
    %2078 = vmatprep.subr.mxu0 0.0
    %v2079 = vand.u32 %v1711, 4294901760
    %v2080 = vsub.f32 %v1711, %v2079
    %2081 = vmatpush1.xpose.msra.mxu0 %v2080
    %2082 = vmatprep.subr.mxu0 0.0
    %v2083 = vand.u32 %v1708, 4294901760
    %v2084 = vsub.f32 %v1708, %v2083
    %2085 = vmatpush1.xpose.msra.mxu0 %v2084
    %2086 = vmatprep.subr.mxu0 0.0
    %v2087 = vand.u32 %v1705, 4294901760
    %v2088 = vsub.f32 %v1705, %v2087
    %2089 = vmatpush1.xpose.msra.mxu0 %v2088
    %2090 = vmatprep.subr.mxu0 0.0
    %2091 = vmatpush2.xpose.msra.mxu0 0.0
    %2092 = vmatprep.subr.mxu0 0.0
    %2093 = vmatpush2.xpose.msra.mxu0 0.0
    %2094 = vmatprep.subr.mxu0 0.0
    %2095 = vmatpush2.xpose.msra.mxu0 0.0
    %2096 = vmatprep.subr.mxu0 0.0
    %2097 = vmatpush2.xpose.msra.mxu0 0.0
    %2098 = vmatprep.subr.mxu0 0.0
    %2099 = vmatpush2.xpose.msra.mxu0 0.0
    %2100 = vmatprep.subr.mxu0 0.0
    %2101 = vmatpush2.xpose.msra.mxu0 0.0
    %2102 = vmatprep.subr.mxu0 0.0
    %2103 = vmatpush2.xpose.msra.mxu0 0.0
    %2104 = vmatprep.subr.mxu0 0.0
    %2105 = vmatpush2.xpose.msra.mxu0 0.0
    %2106 = vmatprep.subr.mxu0 0.0
    %2107 = vmatpush2.xpose.msra.mxu0 0.0
    %2108 = vmatprep.subr.mxu0 0.0
    %2109 = vmatpush2.xpose.msra.mxu0 0.0
    %2110 = vmatprep.subr.mxu0 0.0
    %2111 = vmatpush2.xpose.msra.mxu0 0.0
    %2112 = vmatprep.subr.mxu0 0.0
    %2113 = vmatpush2.xpose.msra.mxu0 0.0
    %2114 = vmatprep.subr.mxu0 0.0
    %2115 = vmatpush2.xpose.msra.mxu0 0.0
    %2116 = vmatprep.subr.mxu0 0.0
    %2117 = vmatpush2.xpose.msra.mxu0 0.0
    %2118 = vmatprep.subr.mxu0 0.0
    %2119 = vmatpush2.xpose.msra.mxu0 0.0
    %2120 = vmatprep.subr.mxu0 0.0
    %2121 = vmatpush2.xpose.msra.mxu0 0.0
    %2122 = vmatprep.mubr.f32.mxu0 0.0
    %v2123 = vand.u32 %v52, 4294901760
    %v2124 = vsub.f32 %v52, %v2123
    %2125 = vmatmul.mubr.f32.gmra.mxu0 %v2124
    %v2126 = vpop.f32.mrf.mxu0
    %v2127 = vadd.f32 %v2011, %v2126
    %v2128 = vpop.f32.mrf.mxu0
    %2129 = vmatprep.mubr.f32.mxu0 0.0
    %v2130 = vand.u32 %v55, 4294901760
    %v2131 = vsub.f32 %v55, %v2130
    %2132 = vmatmul.mubr.f32.gmra.mxu0 %v2131
    %v2133 = vpop.f32.mrf.mxu0
    %v2134 = vadd.f32 %v2017, %v2133
    %v2135 = vpop.f32.mrf.mxu0
    %2136 = vmatprep.mubr.f32.mxu0 0.0
    %v2137 = vand.u32 %v58, 4294901760
    %v2138 = vsub.f32 %v58, %v2137
    %2139 = vmatmul.mubr.f32.gmra.mxu0 %v2138
    %v2140 = vpop.f32.mrf.mxu0
    %v2141 = vadd.f32 %v2023, %v2140
    %v2142 = vpop.f32.mrf.mxu0
    %2143 = vdwg.mxu0
    %2144 = vmatprep.subr.mxu0 0.0
    %v2145 = vand.u32 %v1750, 4294901760
    %2146 = vmatpush1.xpose.msra.mxu0 %v2145
    %2147 = vmatprep.subr.mxu0 0.0
    %v2148 = vand.u32 %v1747, 4294901760
    %2149 = vmatpush1.xpose.msra.mxu0 %v2148
    %2150 = vmatprep.subr.mxu0 0.0
    %v2151 = vand.u32 %v1744, 4294901760
    %2152 = vmatpush1.xpose.msra.mxu0 %v2151
    %2153 = vmatprep.subr.mxu0 0.0
    %v2154 = vand.u32 %v1741, 4294901760
    %2155 = vmatpush1.xpose.msra.mxu0 %v2154
    %2156 = vmatprep.subr.mxu0 0.0
    %v2157 = vand.u32 %v1738, 4294901760
    %2158 = vmatpush1.xpose.msra.mxu0 %v2157
    %2159 = vmatprep.subr.mxu0 0.0
    %v2160 = vand.u32 %v1735, 4294901760
    %2161 = vmatpush1.xpose.msra.mxu0 %v2160
    %2162 = vmatprep.subr.mxu0 0.0
    %v2163 = vand.u32 %v1732, 4294901760
    %2164 = vmatpush1.xpose.msra.mxu0 %v2163
    %2165 = vmatprep.subr.mxu0 0.0
    %v2166 = vand.u32 %v1729, 4294901760
    %2167 = vmatpush1.xpose.msra.mxu0 %v2166
    %2168 = vmatprep.subr.mxu0 0.0
    %v2169 = vand.u32 %v1726, 4294901760
    %2170 = vmatpush1.xpose.msra.mxu0 %v2169
    %2171 = vmatprep.subr.mxu0 0.0
    %v2172 = vand.u32 %v1723, 4294901760
    %2173 = vmatpush1.xpose.msra.mxu0 %v2172
    %2174 = vmatprep.subr.mxu0 0.0
    %v2175 = vand.u32 %v1720, 4294901760
    %2176 = vmatpush1.xpose.msra.mxu0 %v2175
    %2177 = vmatprep.subr.mxu0 0.0
    %v2178 = vand.u32 %v1717, 4294901760
    %2179 = vmatpush1.xpose.msra.mxu0 %v2178
    %2180 = vmatprep.subr.mxu0 0.0
    %v2181 = vand.u32 %v1714, 4294901760
    %2182 = vmatpush1.xpose.msra.mxu0 %v2181
    %2183 = vmatprep.subr.mxu0 0.0
    %v2184 = vand.u32 %v1711, 4294901760
    %2185 = vmatpush1.xpose.msra.mxu0 %v2184
    %2186 = vmatprep.subr.mxu0 0.0
    %v2187 = vand.u32 %v1708, 4294901760
    %2188 = vmatpush1.xpose.msra.mxu0 %v2187
    %2189 = vmatprep.subr.mxu0 0.0
    %v2190 = vand.u32 %v1705, 4294901760
    %2191 = vmatpush1.xpose.msra.mxu0 %v2190
    %2192 = vmatprep.subr.mxu0 0.0
    %2193 = vmatpush2.xpose.msra.mxu0 0.0
    %2194 = vmatprep.subr.mxu0 0.0
    %2195 = vmatpush2.xpose.msra.mxu0 0.0
    %2196 = vmatprep.subr.mxu0 0.0
    %2197 = vmatpush2.xpose.msra.mxu0 0.0
    %2198 = vmatprep.subr.mxu0 0.0
    %2199 = vmatpush2.xpose.msra.mxu0 0.0
    %2200 = vmatprep.subr.mxu0 0.0
    %2201 = vmatpush2.xpose.msra.mxu0 0.0
    %2202 = vmatprep.subr.mxu0 0.0
    %2203 = vmatpush2.xpose.msra.mxu0 0.0
    %2204 = vmatprep.subr.mxu0 0.0
    %2205 = vmatpush2.xpose.msra.mxu0 0.0
    %2206 = vmatprep.subr.mxu0 0.0
    %2207 = vmatpush2.xpose.msra.mxu0 0.0
    %2208 = vmatprep.subr.mxu0 0.0
    %2209 = vmatpush2.xpose.msra.mxu0 0.0
    %2210 = vmatprep.subr.mxu0 0.0
    %2211 = vmatpush2.xpose.msra.mxu0 0.0
    %2212 = vmatprep.subr.mxu0 0.0
    %2213 = vmatpush2.xpose.msra.mxu0 0.0
    %2214 = vmatprep.subr.mxu0 0.0
    %2215 = vmatpush2.xpose.msra.mxu0 0.0
    %2216 = vmatprep.subr.mxu0 0.0
    %2217 = vmatpush2.xpose.msra.mxu0 0.0
    %2218 = vmatprep.subr.mxu0 0.0
    %2219 = vmatpush2.xpose.msra.mxu0 0.0
    %2220 = vmatprep.subr.mxu0 0.0
    %2221 = vmatpush2.xpose.msra.mxu0 0.0
    %2222 = vmatprep.subr.mxu0 0.0
    %2223 = vmatpush2.xpose.msra.mxu0 0.0
    %2224 = vmatprep.mubr.f32.mxu0 0.0
    %v2225 = vand.u32 %v52, 4294901760
    %v2226 = vsub.f32 %v52, %v2225
    %v2227 = vand.u32 %v2226, 4294901760
    %2228 = vmatmul.mubr.f32.gmra.mxu0 %v2227
    %v2229 = vpop.f32.mrf.mxu0
    %v2230 = vadd.f32 %v2127, %v2229
    %v2231 = vpop.f32.mrf.mxu0
    %2232 = vmatprep.mubr.f32.mxu0 0.0
    %v2233 = vand.u32 %v55, 4294901760
    %v2234 = vsub.f32 %v55, %v2233
    %v2235 = vand.u32 %v2234, 4294901760
    %2236 = vmatmul.mubr.f32.gmra.mxu0 %v2235
    %v2237 = vpop.f32.mrf.mxu0
    %v2238 = vadd.f32 %v2134, %v2237
    %v2239 = vpop.f32.mrf.mxu0
    %2240 = vmatprep.mubr.f32.mxu0 0.0
    %v2241 = vand.u32 %v58, 4294901760
    %v2242 = vsub.f32 %v58, %v2241
    %v2243 = vand.u32 %v2242, 4294901760
    %2244 = vmatmul.mubr.f32.gmra.mxu0 %v2243
    %v2245 = vpop.f32.mrf.mxu0
    %v2246 = vadd.f32 %v2141, %v2245
    %v2247 = vpop.f32.mrf.mxu0
    %2248 = vdwg.mxu0
    %2249 = vmatprep.subr.mxu0 0.0
    %v2250 = vand.u32 %v1750, 4294901760
    %v2251 = vsub.f32 %v1750, %v2250
    %v2252 = vand.u32 %v2251, 4294901760
    %2253 = vmatpush1.xpose.msra.mxu0 %v2252
    %2254 = vmatprep.subr.mxu0 0.0
    %v2255 = vand.u32 %v1747, 4294901760
    %v2256 = vsub.f32 %v1747, %v2255
    %v2257 = vand.u32 %v2256, 4294901760
    %2258 = vmatpush1.xpose.msra.mxu0 %v2257
    %2259 = vmatprep.subr.mxu0 0.0
    %v2260 = vand.u32 %v1744, 4294901760
    %v2261 = vsub.f32 %v1744, %v2260
    %v2262 = vand.u32 %v2261, 4294901760
    %2263 = vmatpush1.xpose.msra.mxu0 %v2262
    %2264 = vmatprep.subr.mxu0 0.0
    %v2265 = vand.u32 %v1741, 4294901760
    %v2266 = vsub.f32 %v1741, %v2265
    %v2267 = vand.u32 %v2266, 4294901760
    %2268 = vmatpush1.xpose.msra.mxu0 %v2267
    %2269 = vmatprep.subr.mxu0 0.0
    %v2270 = vand.u32 %v1738, 4294901760
    %v2271 = vsub.f32 %v1738, %v2270
    %v2272 = vand.u32 %v2271, 4294901760
    %2273 = vmatpush1.xpose.msra.mxu0 %v2272
    %2274 = vmatprep.subr.mxu0 0.0
    %v2275 = vand.u32 %v1735, 4294901760
    %v2276 = vsub.f32 %v1735, %v2275
    %v2277 = vand.u32 %v2276, 4294901760
    %2278 = vmatpush1.xpose.msra.mxu0 %v2277
    %2279 = vmatprep.subr.mxu0 0.0
    %v2280 = vand.u32 %v1732, 4294901760
    %v2281 = vsub.f32 %v1732, %v2280
    %v2282 = vand.u32 %v2281, 4294901760
    %2283 = vmatpush1.xpose.msra.mxu0 %v2282
    %2284 = vmatprep.subr.mxu0 0.0
    %v2285 = vand.u32 %v1729, 4294901760
    %v2286 = vsub.f32 %v1729, %v2285
    %v2287 = vand.u32 %v2286, 4294901760
    %2288 = vmatpush1.xpose.msra.mxu0 %v2287
    %2289 = vmatprep.subr.mxu0 0.0
    %v2290 = vand.u32 %v1726, 4294901760
    %v2291 = vsub.f32 %v1726, %v2290
    %v2292 = vand.u32 %v2291, 4294901760
    %2293 = vmatpush1.xpose.msra.mxu0 %v2292
    %2294 = vmatprep.subr.mxu0 0.0
    %v2295 = vand.u32 %v1723, 4294901760
    %v2296 = vsub.f32 %v1723, %v2295
    %v2297 = vand.u32 %v2296, 4294901760
    %2298 = vmatpush1.xpose.msra.mxu0 %v2297
    %2299 = vmatprep.subr.mxu0 0.0
    %v2300 = vand.u32 %v1720, 4294901760
    %v2301 = vsub.f32 %v1720, %v2300
    %v2302 = vand.u32 %v2301, 4294901760
    %2303 = vmatpush1.xpose.msra.mxu0 %v2302
    %2304 = vmatprep.subr.mxu0 0.0
    %v2305 = vand.u32 %v1717, 4294901760
    %v2306 = vsub.f32 %v1717, %v2305
    %v2307 = vand.u32 %v2306, 4294901760
    %2308 = vmatpush1.xpose.msra.mxu0 %v2307
    %2309 = vmatprep.subr.mxu0 0.0
    %v2310 = vand.u32 %v1714, 4294901760
    %v2311 = vsub.f32 %v1714, %v2310
    %v2312 = vand.u32 %v2311, 4294901760
    %2313 = vmatpush1.xpose.msra.mxu0 %v2312
    %2314 = vmatprep.subr.mxu0 0.0
    %v2315 = vand.u32 %v1711, 4294901760
    %v2316 = vsub.f32 %v1711, %v2315
    %v2317 = vand.u32 %v2316, 4294901760
    %2318 = vmatpush1.xpose.msra.mxu0 %v2317
    %2319 = vmatprep.subr.mxu0 0.0
    %v2320 = vand.u32 %v1708, 4294901760
    %v2321 = vsub.f32 %v1708, %v2320
    %v2322 = vand.u32 %v2321, 4294901760
    %2323 = vmatpush1.xpose.msra.mxu0 %v2322
    %2324 = vmatprep.subr.mxu0 0.0
    %v2325 = vand.u32 %v1705, 4294901760
    %v2326 = vsub.f32 %v1705, %v2325
    %v2327 = vand.u32 %v2326, 4294901760
    %2328 = vmatpush1.xpose.msra.mxu0 %v2327
    %2329 = vmatprep.subr.mxu0 0.0
    %2330 = vmatpush2.xpose.msra.mxu0 0.0
    %2331 = vmatprep.subr.mxu0 0.0
    %2332 = vmatpush2.xpose.msra.mxu0 0.0
    %2333 = vmatprep.subr.mxu0 0.0
    %2334 = vmatpush2.xpose.msra.mxu0 0.0
    %2335 = vmatprep.subr.mxu0 0.0
    %2336 = vmatpush2.xpose.msra.mxu0 0.0
    %2337 = vmatprep.subr.mxu0 0.0
    %2338 = vmatpush2.xpose.msra.mxu0 0.0
    %2339 = vmatprep.subr.mxu0 0.0
    %2340 = vmatpush2.xpose.msra.mxu0 0.0
    %2341 = vmatprep.subr.mxu0 0.0
    %2342 = vmatpush2.xpose.msra.mxu0 0.0
    %2343 = vmatprep.subr.mxu0 0.0
    %2344 = vmatpush2.xpose.msra.mxu0 0.0
    %2345 = vmatprep.subr.mxu0 0.0
    %2346 = vmatpush2.xpose.msra.mxu0 0.0
    %2347 = vmatprep.subr.mxu0 0.0
    %2348 = vmatpush2.xpose.msra.mxu0 0.0
    %2349 = vmatprep.subr.mxu0 0.0
    %2350 = vmatpush2.xpose.msra.mxu0 0.0
    %2351 = vmatprep.subr.mxu0 0.0
    %2352 = vmatpush2.xpose.msra.mxu0 0.0
    %2353 = vmatprep.subr.mxu0 0.0
    %2354 = vmatpush2.xpose.msra.mxu0 0.0
    %2355 = vmatprep.subr.mxu0 0.0
    %2356 = vmatpush2.xpose.msra.mxu0 0.0
    %2357 = vmatprep.subr.mxu0 0.0
    %2358 = vmatpush2.xpose.msra.mxu0 0.0
    %2359 = vmatprep.subr.mxu0 0.0
    %2360 = vmatpush2.xpose.msra.mxu0 0.0
    %2361 = vmatprep.mubr.f32.mxu0 0.0
    %v2362 = vand.u32 %v52, 4294901760
    %2363 = vmatmul.mubr.f32.gmra.mxu0 %v2362
    %v2364 = vpop.f32.mrf.mxu0
    %v2365 = vadd.f32 %v2230, %v2364
    %v2366 = vpop.f32.mrf.mxu0
    %2367 = vmatprep.mubr.f32.mxu0 0.0
    %v2368 = vand.u32 %v55, 4294901760
    %2369 = vmatmul.mubr.f32.gmra.mxu0 %v2368
    %v2370 = vpop.f32.mrf.mxu0
    %v2371 = vadd.f32 %v2238, %v2370
    %v2372 = vpop.f32.mrf.mxu0
    %2373 = vmatprep.mubr.f32.mxu0 0.0
    %v2374 = vand.u32 %v58, 4294901760
    %2375 = vmatmul.mubr.f32.gmra.mxu0 %v2374
    %v2376 = vpop.f32.mrf.mxu0
    %v2377 = vadd.f32 %v2246, %v2376
    %v2378 = vpop.f32.mrf.mxu0
    %2379 = vdwg.mxu0
    %2380 = vmatprep.subr.mxu0 0.0
    %v2381 = vand.u32 %v1750, 4294901760
    %2382 = vmatpush1.xpose.msra.mxu0 %v2381
    %2383 = vmatprep.subr.mxu0 0.0
    %v2384 = vand.u32 %v1747, 4294901760
    %2385 = vmatpush1.xpose.msra.mxu0 %v2384
    %2386 = vmatprep.subr.mxu0 0.0
    %v2387 = vand.u32 %v1744, 4294901760
    %2388 = vmatpush1.xpose.msra.mxu0 %v2387
    %2389 = vmatprep.subr.mxu0 0.0
    %v2390 = vand.u32 %v1741, 4294901760
    %2391 = vmatpush1.xpose.msra.mxu0 %v2390
    %2392 = vmatprep.subr.mxu0 0.0
    %v2393 = vand.u32 %v1738, 4294901760
    %2394 = vmatpush1.xpose.msra.mxu0 %v2393
    %2395 = vmatprep.subr.mxu0 0.0
    %v2396 = vand.u32 %v1735, 4294901760
    %2397 = vmatpush1.xpose.msra.mxu0 %v2396
    %2398 = vmatprep.subr.mxu0 0.0
    %v2399 = vand.u32 %v1732, 4294901760
    %2400 = vmatpush1.xpose.msra.mxu0 %v2399
    %2401 = vmatprep.subr.mxu0 0.0
    %v2402 = vand.u32 %v1729, 4294901760
    %2403 = vmatpush1.xpose.msra.mxu0 %v2402
    %2404 = vmatprep.subr.mxu0 0.0
    %v2405 = vand.u32 %v1726, 4294901760
    %2406 = vmatpush1.xpose.msra.mxu0 %v2405
    %2407 = vmatprep.subr.mxu0 0.0
    %v2408 = vand.u32 %v1723, 4294901760
    %2409 = vmatpush1.xpose.msra.mxu0 %v2408
    %2410 = vmatprep.subr.mxu0 0.0
    %v2411 = vand.u32 %v1720, 4294901760
    %2412 = vmatpush1.xpose.msra.mxu0 %v2411
    %2413 = vmatprep.subr.mxu0 0.0
    %v2414 = vand.u32 %v1717, 4294901760
    %2415 = vmatpush1.xpose.msra.mxu0 %v2414
    %2416 = vmatprep.subr.mxu0 0.0
    %v2417 = vand.u32 %v1714, 4294901760
    %2418 = vmatpush1.xpose.msra.mxu0 %v2417
    %2419 = vmatprep.subr.mxu0 0.0
    %v2420 = vand.u32 %v1711, 4294901760
    %2421 = vmatpush1.xpose.msra.mxu0 %v2420
    %2422 = vmatprep.subr.mxu0 0.0
    %v2423 = vand.u32 %v1708, 4294901760
    %2424 = vmatpush1.xpose.msra.mxu0 %v2423
    %2425 = vmatprep.subr.mxu0 0.0
    %v2426 = vand.u32 %v1705, 4294901760
    %2427 = vmatpush1.xpose.msra.mxu0 %v2426
    %2428 = vmatprep.subr.mxu0 0.0
    %2429 = vmatpush2.xpose.msra.mxu0 0.0
    %2430 = vmatprep.subr.mxu0 0.0
    %2431 = vmatpush2.xpose.msra.mxu0 0.0
    %2432 = vmatprep.subr.mxu0 0.0
    %2433 = vmatpush2.xpose.msra.mxu0 0.0
    %2434 = vmatprep.subr.mxu0 0.0
    %2435 = vmatpush2.xpose.msra.mxu0 0.0
    %2436 = vmatprep.subr.mxu0 0.0
    %2437 = vmatpush2.xpose.msra.mxu0 0.0
    %2438 = vmatprep.subr.mxu0 0.0
    %2439 = vmatpush2.xpose.msra.mxu0 0.0
    %2440 = vmatprep.subr.mxu0 0.0
    %2441 = vmatpush2.xpose.msra.mxu0 0.0
    %2442 = vmatprep.subr.mxu0 0.0
    %2443 = vmatpush2.xpose.msra.mxu0 0.0
    %2444 = vmatprep.subr.mxu0 0.0
    %2445 = vmatpush2.xpose.msra.mxu0 0.0
    %2446 = vmatprep.subr.mxu0 0.0
    %2447 = vmatpush2.xpose.msra.mxu0 0.0
    %2448 = vmatprep.subr.mxu0 0.0
    %2449 = vmatpush2.xpose.msra.mxu0 0.0
    %2450 = vmatprep.subr.mxu0 0.0
    %2451 = vmatpush2.xpose.msra.mxu0 0.0
    %2452 = vmatprep.subr.mxu0 0.0
    %2453 = vmatpush2.xpose.msra.mxu0 0.0
    %2454 = vmatprep.subr.mxu0 0.0
    %2455 = vmatpush2.xpose.msra.mxu0 0.0
    %2456 = vmatprep.subr.mxu0 0.0
    %2457 = vmatpush2.xpose.msra.mxu0 0.0
    %2458 = vmatprep.subr.mxu0 0.0
    %2459 = vmatpush2.xpose.msra.mxu0 0.0
    %2460 = vmatprep.mubr.f32.mxu0 0.0
    %v2461 = vand.u32 %v52, 4294901760
    %2462 = vmatmul.mubr.f32.gmra.mxu0 %v2461
    %v2463 = vpop.f32.mrf.mxu0
    %v2464 = vadd.f32 %v2365, %v2463
    %v2465 = vpop.f32.mrf.mxu0
    %2466 = vmatprep.mubr.f32.mxu0 0.0
    %v2467 = vand.u32 %v55, 4294901760
    %2468 = vmatmul.mubr.f32.gmra.mxu0 %v2467
    %v2469 = vpop.f32.mrf.mxu0
    %v2470 = vadd.f32 %v2371, %v2469
    %v2471 = vpop.f32.mrf.mxu0
    %2472 = vmatprep.mubr.f32.mxu0 0.0
    %v2473 = vand.u32 %v58, 4294901760
    %2474 = vmatmul.mubr.f32.gmra.mxu0 %v2473
    %v2475 = vpop.f32.mrf.mxu0
    %v2476 = vadd.f32 %v2377, %v2475
    %v2477 = vpop.f32.mrf.mxu0
    %2478 = vdwg.mxu0
    %v2479 = vmul.f32 %v1671, %v2470
    %v2480 = vrot.slane %v2479, 4
    %v2481 = vadd.f32 %v2479, %v2480
    %v2482 = vrot.slane %v2481, 2
    %v2483 = vadd.f32 %v2481, %v2482
    %v2484 = vrot.slane %v2483, 1
    %v2485 = vadd.f32 %v2483, %v2484
    %v2486 = vadd.f32 %v2485, %v2464
    %v2487 = vtanh.pop %v2486
    %v2488 = vlaneseq
    %v2489 = vshrl.u32 %v2488, 7
    %v2490 = vsub.s32 0, %v2489
    %v2491 = vrot.slane %v2487, %v2490
    %v2492 = vmul.f32 %v2476, %v2491
    %v2493 = vadd.f32 %v1671, %v2492
    %v2494 = vmul.f32 %v2470, %v2476
    %v2495 = vrot.slane %v2494, 4
    %v2496 = vadd.f32 %v2494, %v2495
    %v2497 = vrot.slane %v2496, 2
    %v2498 = vadd.f32 %v2496, %v2497
    %v2499 = vrot.slane %v2498, 1
    %v2500 = vadd.f32 %v2498, %v2499
    %v2501 = vmul.f32 %v2487, %v2487
    %v2502 = vsub.f32 1.0, %v2501
    %v2503 = vmul.f32 %v2502, %v2500
    %v2504 = vadd.f32 %v2503, 1.0
    %v2505 = vand.u32 2147483647, %v2504
    %v2506 = vlog2.pop %v2505
    %v2507 = vmul.f32 %v2506, 0.6931472
    %v2508 = vadd.f32 %v1686, %v2507
    %2509 = vst [vmem:[#allocation5] sm:$0xff] %v2493
    %2510 = vst [vmem:[#allocation6] sm:$0x1] %v2508
    // Predicated region
    $region18: #{tpu_custom_call.1} parent=1 // pred_check
      _
    $region19: #{tpu_custom_call.1} parent=1 // pred_check_branch
      %2512 = sbr.rel (0) target = $region21
    $region20: #{tpu_custom_call.1} parent=1 // pred_region
      %s2514 = ssub.s32 128, 128
      %2515 = vsyncadd [#allocation4], %s2514
      %s2517 = sshll.u32 [#allocation5], 4
      %s2518 = int_to_ptr.vmem [resolvable:$true] %s2517
      %2520 = dma.vmem_to_hbm [thread:$0]  %s2518, 128, %s3, [#allocation4]
    $region21: #{tpu_custom_call.1} parent=1 // pred_fallthru
      _
    // Predicated region
    $region22: #{tpu_custom_call.1} parent=1 // pred_check
      _
    $region23: #{tpu_custom_call.1} parent=1 // pred_check_branch
      %2522 = sbr.rel (0) target = $region25
    $region24: #{tpu_custom_call.1} parent=1 // pred_region
      %s2524 = ssub.s32 16, 16
      %2525 = vsyncadd [#allocation7], %s2524
      %s2527 = sshll.u32 [#allocation6], 4
      %s2528 = int_to_ptr.vmem [resolvable:$true] %s2527
      %2530 = dma.vmem_to_hbm [thread:$0]  %s2528, 16, %s4, [#allocation7]
    $region25: #{tpu_custom_call.1} parent=1 // pred_fallthru
      _
    // Predicated region
    $region26: #{tpu_custom_call.1} parent=1 // pred_check
      _
    $region27: #{tpu_custom_call.1} parent=1 // pred_check_branch
      %2532 = sbr.rel (0) target = $region29
    $region28: #{tpu_custom_call.1} parent=1 // pred_region
      %2533 = dma.done [#allocation4], 128
    $region29: #{tpu_custom_call.1} parent=1 // pred_fallthru
      _
    // Predicated region
    $region30: #{tpu_custom_call.1} parent=1 // pred_check
      _
    $region31: #{tpu_custom_call.1} parent=1 // pred_check_branch
      %2535 = sbr.rel (0) target = $region33
    $region32: #{tpu_custom_call.1} parent=1 // pred_region
      %2536 = dma.done [#allocation7], 16
    $region33: #{tpu_custom_call.1} parent=1 // pred_fallthru
      _
    %2537 = vsyncpa [#allocation3], 1
    %2538 = vsyncpa [#allocation4], 1
    %2539 = vsyncpa [#allocation7], 1

</llo_original>
